<compile_context>
chip_gen: v5e
topology: v5e:2x2
jax: 0.10.0
libtpu: 0.0.40
codegen_flags: <defaults>
</compile_context>

<pallas_src>
import functools

import jax
import jax.numpy as jnp
from jax.experimental import pallas as pl
from jax.experimental.pallas import tpu as pltpu


def _round_up(n, m):
    return ((n + m - 1) // m) * m


def _pad2(a, rows, cols):
    a = a.astype(jnp.float32)
    return jnp.pad(a, ((0, rows - a.shape[0]), (0, cols - a.shape[1])))


# ----------------------------------------------------------------------------
# Fused Pallas kernel: pool+embed (both nets, all views, one matmul) -> heads ->
# compose / decompose -> L2 normalize.  Everything lives in VMEM.
# ----------------------------------------------------------------------------
def _adamv2_fused_kernel(
    x_ref,                                   # [V*B, C*HW]
    we_ref, be_ref,                          # fused embed (pool folded): [C*HW, 2*DP], [1, 2*DP]
    wsh_ref, bsh_ref,                        # student head  [DP, KP], [1, KP]
    wth_ref, bth_ref,                        # teacher head  [DP, KP], [1, KP]
    wc_ref, bc_ref,                          # compose head  [nb_parts, DP, DP], [1, DP]
    wd_ref, bd_ref,                          # decompose head [DP, PDP], [1, PDP]
    s_loc_ref, t_loc_ref, s_comp_ref, t_comp_ref, s_dec_ref, t_dec_ref,
    *, B, nb_crops, nb_parts, DP,
):
    x = x_ref[...]

    # One batched MXU matmul covers BOTH networks and every view (pool already
    # folded into the weights, so this is GlobalAvgPool + Linear in a single
    # contraction).  Student lanes [0, DP), teacher lanes [DP, 2*DP): vreg-aligned.
    feat = jnp.dot(x, we_ref[...], preferred_element_type=jnp.float32) + be_ref[...]
    feat_s = feat[:, :DP]
    feat_t = feat[:, DP:2 * DP]

    def l2norm(y):
        # Padded columns are exactly zero, so the norm over the padded width equals
        # the norm over the true feature width.  rsqrt -> EUP slot.
        ss = jnp.sum(y * y, axis=1, keepdims=True)
        return y * jax.lax.rsqrt(jnp.maximum(ss, 1e-24))

    # --- view slices (all static) ---
    t0 = feat_t[0:B]                                   # teacher(x[0])
    s0 = feat_s[0:B]                                   # student(x[0])
    s_crops = feat_s[B:(nb_crops + 1) * B]             # student(x[1:nb_crops+1])
    t_parts = feat_t[(nb_crops + 1) * B:]              # teacher(part views)

    # teacher_locality = teacher(x[0], apply_head=True)
    t_loc_ref[...] = (
        jnp.dot(t0, wth_ref[...], preferred_element_type=jnp.float32) + bth_ref[...]
    )
    # student_locality = student(crops, apply_head=True)
    s_loc_ref[...] = (
        jnp.dot(s_crops, wsh_ref[...], preferred_element_type=jnp.float32) + bsh_ref[...]
    )
    # teacher_compose = normalize(teacher(x[0]))
    t_comp_ref[...] = l2norm(t0)
    # teacher_decompose = normalize(teacher(part_i))  (stacked part-major)
    t_dec_ref[...] = l2norm(t_parts)

    # student_compose = normalize(compose_head(cat_p student(part_p), dim=1))
    # cat-along-features @ Wc  ==  sum_p  feat_part_p @ Wc[p*D:(p+1)*D, :]
    acc = (
        jnp.dot(feat_s[(nb_crops + 1) * B:(nb_crops + 2) * B], wc_ref[0],
                preferred_element_type=jnp.float32)
        + bc_ref[...]
    )
    for p in range(1, nb_parts):
        fp = feat_s[(nb_crops + 1 + p) * B:(nb_crops + 2 + p) * B]
        acc = acc + jnp.dot(fp, wc_ref[p], preferred_element_type=jnp.float32)
    s_comp_ref[...] = l2norm(acc)

    # student_decompose = normalize(decompose_head(student(x[0])))
    s_dec_ref[...] = l2norm(
        jnp.dot(s0, wd_ref[...], preferred_element_type=jnp.float32) + bd_ref[...]
    )


# ----------------------------------------------------------------------------
# Wrapper: weight preparation (pool folding + lane-dense zero padding + fusing
# the two embed matrices along lanes), one pallas_call, then cheap slicing back
# to the true feature widths.
# ----------------------------------------------------------------------------
def adamv2_forward(x, params, *, nb_crops, nb_parts):
    V, B, C, H, W = x.shape
    HW = H * W
    D = params["student_w"].shape[1]
    K = params["student_head_w"].shape[1]
    PD = nb_parts * D
    DP, KP, PDP = _round_up(D, 128), _round_up(K, 128), _round_up(PD, 128)

    # Views stay contiguous: no per-view concatenate, just a reshape.
    x_all = x.reshape(V * B, C * HW).astype(jnp.float32)

    # Fold the global average pool into the embed weights: row (c*HW + s) of the
    # folded matrix is W[c, :] / HW, so  x_flat @ W_fold == mean_pool(x) @ W.
    def fold_pool(w):
        return jnp.repeat(w.astype(jnp.float32), HW, axis=0) / float(HW)

    ws = _pad2(fold_pool(params["student_w"]), C * HW, DP)
    wt = _pad2(fold_pool(params["teacher_w"]), C * HW, DP)
    bs = _pad2(params["student_b"], 1, DP)
    bt = _pad2(params["teacher_b"], 1, DP)
    # Fuse both networks' embed weights along lanes: one MXU push of x.
    we = jnp.concatenate([ws, wt], axis=1)            # [C*HW, 2*DP]
    be = jnp.concatenate([bs, bt], axis=1)            # [1, 2*DP]

    wsh = _pad2(params["student_head_w"], DP, KP)
    wth = _pad2(params["teacher_head_w"], DP, KP)
    bsh = _pad2(params["student_head_b"], 1, KP)
    bth = _pad2(params["teacher_head_b"], 1, KP)
    # compose: [nb_parts*D, D] -> [nb_parts, DP, DP] (per-part chunk, zero padded)
    wc = (
        jnp.zeros((nb_parts, DP, DP), jnp.float32)
        .at[:, :D, :D]
        .set(params["compose_w"].astype(jnp.float32).reshape(nb_parts, D, D))
    )
    bc = _pad2(params["compose_b"], 1, DP)
    wd = _pad2(params["decompose_w"], DP, PDP)
    bd = _pad2(params["decompose_b"], 1, PDP)

    out_shapes = (
        jax.ShapeDtypeStruct((nb_crops * B, KP), jnp.float32),   # student_locality
        jax.ShapeDtypeStruct((B, KP), jnp.float32),              # teacher_locality
        jax.ShapeDtypeStruct((B, DP), jnp.float32),              # student_compose
        jax.ShapeDtypeStruct((B, DP), jnp.float32),              # teacher_compose
        jax.ShapeDtypeStruct((B, PDP), jnp.float32),             # student_decompose
        jax.ShapeDtypeStruct((nb_parts * B, DP), jnp.float32),   # teacher_decompose
    )

    def full_spec(shape):
        return pl.BlockSpec(shape, lambda i: (0,) * len(shape))

    inputs = (x_all, we, be, wsh, bsh, wth, bth, wc, bc, wd, bd)
    in_specs = [full_spec(a.shape) for a in inputs]
    out_specs = [full_spec(s.shape) for s in out_shapes]

    kernel = functools.partial(
        _adamv2_fused_kernel, B=B, nb_crops=nb_crops, nb_parts=nb_parts, DP=DP
    )

    outs = pl.pallas_call(
        kernel,
        out_shape=out_shapes,
        grid=(1,),
        in_specs=in_specs,
        out_specs=out_specs,
        compiler_params=pltpu.CompilerParams(dimension_semantics=("arbitrary",)),
    )(*inputs)

    s_loc_p, t_loc_p, s_comp_p, t_comp_p, s_dec_p, t_dec_p = outs

    student_locality = s_loc_p[:, :K]
    teacher_locality = t_loc_p[:, :K]
    student_compose = s_comp_p[:, :D]
    teacher_compose = jax.lax.stop_gradient(t_comp_p[:, :D])         # .detach()
    student_decompose = s_dec_p[:, :PD]
    t_dec = t_dec_p[:, :D].reshape(nb_parts, B, D)
    teacher_decompose = [jax.lax.stop_gradient(t_dec[p]) for p in range(nb_parts)]

    return (student_locality, teacher_locality, student_compose, teacher_compose,
            student_decompose, teacher_decompose)


# ----------------------------------------------------------------------------
# Pure-JAX reference (mirrors the PyTorch forward literally) for validation.
# ----------------------------------------------------------------------------
def adamv2_reference(x, params, *, nb_crops, nb_parts):
    def backbone(v, which):
        pooled = jnp.mean(v.reshape(v.shape[0], v.shape[1], -1), axis=2)
        return pooled @ params[f"{which}_w"] + params[f"{which}_b"]

    def head(f, which):
        return f @ params[f"{which}_head_w"] + params[f"{which}_head_b"]

    def norm(y):
        n = jnp.linalg.norm(y, axis=1, keepdims=True)
        return y / jnp.maximum(n, 1e-12)

    teacher_locality = head(backbone(x[0], "teacher"), "teacher")
    crops = jnp.concatenate([x[i] for i in range(1, nb_crops + 1)], axis=0)
    student_locality = head(backbone(crops, "student"), "student")
    parts = [backbone(x[i], "student")
             for i in range(nb_crops + 1, nb_crops + 1 + nb_parts)]
    student_compose = norm(
        jnp.concatenate(parts, axis=1) @ params["compose_w"] + params["compose_b"])
    teacher_compose = norm(backbone(x[0], "teacher"))
    student_decompose = norm(
        backbone(x[0], "student") @ params["decompose_w"] + params["decompose_b"])
    teacher_decompose = [norm(backbone(x[i], "teacher"))
                         for i in range(nb_crops + 1, nb_crops + 1 + nb_parts)]
    return (student_locality, teacher_locality, student_compose, teacher_compose,
            student_decompose, teacher_decompose)


def init_params(key, C, D, K, nb_parts):
    ks = jax.random.split(key, 12)
    f32 = jnp.float32

    def lin(kw, din, dout):
        return jax.random.normal(kw, (din, dout), f32) * (1.0 / jnp.sqrt(din))

    def bias(kb, dout):
        return 0.1 * jax.random.normal(kb, (1, dout), f32)

    return {
        "student_w": lin(ks[0], C, D), "student_b": bias(ks[6], D),
        "teacher_w": lin(ks[1], C, D), "teacher_b": bias(ks[7], D),
        "student_head_w": lin(ks[2], D, K), "student_head_b": bias(ks[8], K),
        "teacher_head_w": lin(ks[3], D, K), "teacher_head_b": bias(ks[9], K),
        "compose_w": lin(ks[4], nb_parts * D, D), "compose_b": bias(ks[10], D),
        "decompose_w": lin(ks[5], D, nb_parts * D),
        "decompose_b": bias(ks[11], nb_parts * D),
    }


if __name__ == "__main__":
    # Small, deterministic configuration
    B, C, H, W = 2, 4, 16, 16
    D, K = 32, 16                 # backbone embed dim, head output dim
    nb_crops, nb_parts = 2, 3
    num_views = 1 + nb_crops + nb_parts

    key = jax.random.PRNGKey(0)
    k_x, k_p = jax.random.split(key)

    x = jax.random.normal(k_x, (num_views, B, C, H, W), jnp.float32)
    params = init_params(k_p, C, D, K, nb_parts)

    fwd = jax.jit(functools.partial(adamv2_forward, nb_crops=nb_crops, nb_parts=nb_parts))
    outs = fwd(x, params)
    jax.block_until_ready(jax.tree_util.tree_leaves(outs))

    (student_locality, teacher_locality, student_compose,
     teacher_compose, student_decompose, teacher_decompose) = outs

    # shape / normalization sanity checks
    assert student_locality.shape == (nb_crops * B, K)
    assert teacher_locality.shape == (B, K)
    assert student_compose.shape == (B, D)
    assert teacher_compose.shape == (B, D)
    assert student_decompose.shape == (B, nb_parts * D)
    assert len(teacher_decompose) == nb_parts
    assert all(t.shape == (B, D) for t in teacher_decompose)
    assert jnp.allclose(jnp.linalg.norm(student_compose, axis=1), 1.0, atol=1e-4)
    assert jnp.allclose(jnp.linalg.norm(student_decompose, axis=1), 1.0, atol=1e-4)

    # numerical check against the literal (mean-pool then matmul) reference;
    # tolerance is loose because the fused kernel folds the pool into the MXU
    # contraction (different accumulation order under default matmul precision).
    ref = adamv2_reference(x, params, nb_crops=nb_crops, nb_parts=nb_parts)
    for got, want in zip(jax.tree_util.tree_leaves(outs), jax.tree_util.tree_leaves(ref)):
        max_err = float(jnp.max(jnp.abs(got - want)))
        assert max_err < 3e-2, f"mismatch vs reference: max abs err {max_err}"

    print("KERNEL_OK")
</pallas_src>

<mosaic_0001>
module attributes {stable_mosaic.version = 11 : i64} {
  func.func @_adamv2_fused_kernel(%arg0: i32, %arg1: memref<12x1024xf32, #tpu.memory_space<vmem>>, %arg2: memref<1024x256xf32, #tpu.memory_space<vmem>>, %arg3: memref<1x256xf32, #tpu.memory_space<vmem>>, %arg4: memref<128x128xf32, #tpu.memory_space<vmem>>, %arg5: memref<1x128xf32, #tpu.memory_space<vmem>>, %arg6: memref<128x128xf32, #tpu.memory_space<vmem>>, %arg7: memref<1x128xf32, #tpu.memory_space<vmem>>, %arg8: memref<3x128x128xf32, #tpu.memory_space<vmem>>, %arg9: memref<1x128xf32, #tpu.memory_space<vmem>>, %arg10: memref<128x128xf32, #tpu.memory_space<vmem>>, %arg11: memref<1x128xf32, #tpu.memory_space<vmem>>, %arg12: memref<4x128xf32, #tpu.memory_space<vmem>>, %arg13: memref<2x128xf32, #tpu.memory_space<vmem>>, %arg14: memref<2x128xf32, #tpu.memory_space<vmem>>, %arg15: memref<2x128xf32, #tpu.memory_space<vmem>>, %arg16: memref<2x128xf32, #tpu.memory_space<vmem>>, %arg17: memref<6x128xf32, #tpu.memory_space<vmem>>) attributes {dimension_semantics = [#tpu.dimension_semantics<arbitrary>], iteration_bounds = array<i64: 1>, scalar_prefetch = 0 : i64, scratch_operands = 0 : i64, tpu.core_type = #tpu.core_type<tc>, window_params = [{pipeline_mode = #tpu.pipeline_mode<synchronous>, transform_indices = @transform_0, window_bounds = array<i64: 12, 1024>}, {pipeline_mode = #tpu.pipeline_mode<synchronous>, transform_indices = @transform_1, window_bounds = array<i64: 1024, 256>}, {pipeline_mode = #tpu.pipeline_mode<synchronous>, transform_indices = @transform_2, window_bounds = array<i64: 1, 256>}, {pipeline_mode = #tpu.pipeline_mode<synchronous>, transform_indices = @transform_3, window_bounds = array<i64: 128, 128>}, {pipeline_mode = #tpu.pipeline_mode<synchronous>, transform_indices = @transform_4, window_bounds = array<i64: 1, 128>}, {pipeline_mode = #tpu.pipeline_mode<synchronous>, transform_indices = @transform_5, window_bounds = array<i64: 128, 128>}, {pipeline_mode = #tpu.pipeline_mode<synchronous>, transform_indices = @transform_6, window_bounds = array<i64: 1, 128>}, {pipeline_mode = #tpu.pipeline_mode<synchronous>, transform_indices = @transform_7, window_bounds = array<i64: 3, 128, 128>}, {pipeline_mode = #tpu.pipeline_mode<synchronous>, transform_indices = @transform_8, window_bounds = array<i64: 1, 128>}, {pipeline_mode = #tpu.pipeline_mode<synchronous>, transform_indices = @transform_9, window_bounds = array<i64: 128, 128>}, {pipeline_mode = #tpu.pipeline_mode<synchronous>, transform_indices = @transform_10, window_bounds = array<i64: 1, 128>}, {pipeline_mode = #tpu.pipeline_mode<synchronous>, transform_indices = @transform_11, window_bounds = array<i64: 4, 128>}, {pipeline_mode = #tpu.pipeline_mode<synchronous>, transform_indices = @transform_12, window_bounds = array<i64: 2, 128>}, {pipeline_mode = #tpu.pipeline_mode<synchronous>, transform_indices = @transform_13, window_bounds = array<i64: 2, 128>}, {pipeline_mode = #tpu.pipeline_mode<synchronous>, transform_indices = @transform_14, window_bounds = array<i64: 2, 128>}, {pipeline_mode = #tpu.pipeline_mode<synchronous>, transform_indices = @transform_15, window_bounds = array<i64: 2, 128>}, {pipeline_mode = #tpu.pipeline_mode<synchronous>, transform_indices = @transform_16, window_bounds = array<i64: 6, 128>}]} {
    %c0 = arith.constant 0 : index
    %c0_0 = arith.constant 0 : index
    %0 = vector.load %arg1[%c0, %c0_0] : memref<12x1024xf32, #tpu.memory_space<vmem>>, vector<12x1024xf32>
    %c0_1 = arith.constant 0 : index
    %c0_2 = arith.constant 0 : index
    %1 = vector.load %arg2[%c0_1, %c0_2] : memref<1024x256xf32, #tpu.memory_space<vmem>>, vector<1024x256xf32>
    %cst = arith.constant dense<0.000000e+00> : vector<12x256xf32>
    %2 = tpu.matmul %0, %1, %cst {dimension_numbers = #tpu.dot_dimension_numbers<[1], [0], [0], [1], [0, 0, 1, 1], [], []>} : vector<12x1024xf32>, vector<1024x256xf32>, vector<12x256xf32> -> vector<12x256xf32>
    %c0_3 = arith.constant 0 : index
    %c0_4 = arith.constant 0 : index
    %3 = vector.load %arg3[%c0_3, %c0_4] : memref<1x256xf32, #tpu.memory_space<vmem>>, vector<1x256xf32>
    %4 = vector.broadcast %3 : vector<1x256xf32> to vector<12x256xf32>
    %5 = arith.addf %2, %4 : vector<12x256xf32>
    %6 = vector.extract_strided_slice %5 {offsets = [0, 0], sizes = [12, 128], strides = [1, 1]} : vector<12x256xf32> to vector<12x128xf32>
    %7 = vector.extract_strided_slice %5 {offsets = [0, 128], sizes = [12, 128], strides = [1, 1]} : vector<12x256xf32> to vector<12x128xf32>
    %8 = vector.extract_strided_slice %7 {offsets = [0, 0], sizes = [2, 128], strides = [1, 1]} : vector<12x128xf32> to vector<2x128xf32>
    %9 = vector.extract_strided_slice %6 {offsets = [0, 0], sizes = [2, 128], strides = [1, 1]} : vector<12x128xf32> to vector<2x128xf32>
    %10 = vector.extract_strided_slice %6 {offsets = [2, 0], sizes = [4, 128], strides = [1, 1]} : vector<12x128xf32> to vector<4x128xf32>
    %11 = vector.extract_strided_slice %7 {offsets = [6, 0], sizes = [6, 128], strides = [1, 1]} : vector<12x128xf32> to vector<6x128xf32>
    %c0_5 = arith.constant 0 : index
    %c0_6 = arith.constant 0 : index
    %12 = vector.load %arg6[%c0_5, %c0_6] : memref<128x128xf32, #tpu.memory_space<vmem>>, vector<128x128xf32>
    %cst_7 = arith.constant dense<0.000000e+00> : vector<2x128xf32>
    %13 = tpu.matmul %8, %12, %cst_7 {dimension_numbers = #tpu.dot_dimension_numbers<[1], [0], [0], [1], [0, 0, 1, 1], [], []>} : vector<2x128xf32>, vector<128x128xf32>, vector<2x128xf32> -> vector<2x128xf32>
    %c0_8 = arith.constant 0 : index
    %c0_9 = arith.constant 0 : index
    %14 = vector.load %arg7[%c0_8, %c0_9] : memref<1x128xf32, #tpu.memory_space<vmem>>, vector<1x128xf32>
    %15 = vector.broadcast %14 : vector<1x128xf32> to vector<2x128xf32>
    %16 = arith.addf %13, %15 : vector<2x128xf32>
    %c0_10 = arith.constant 0 : index
    %c0_11 = arith.constant 0 : index
    %17 = vector.load %arg13[%c0_10, %c0_11] : memref<2x128xf32, #tpu.memory_space<vmem>>, vector<2x128xf32>
    tpu.vector_store %arg13[%c0_10, %c0_11], %16 {strides = array<i32>} : memref<2x128xf32, #tpu.memory_space<vmem>>, vector<2x128xf32>,
    %c0_12 = arith.constant 0 : index
    %c0_13 = arith.constant 0 : index
    %18 = vector.load %arg4[%c0_12, %c0_13] : memref<128x128xf32, #tpu.memory_space<vmem>>, vector<128x128xf32>
    %cst_14 = arith.constant dense<0.000000e+00> : vector<4x128xf32>
    %19 = tpu.matmul %10, %18, %cst_14 {dimension_numbers = #tpu.dot_dimension_numbers<[1], [0], [0], [1], [0, 0, 1, 1], [], []>} : vector<4x128xf32>, vector<128x128xf32>, vector<4x128xf32> -> vector<4x128xf32>
    %c0_15 = arith.constant 0 : index
    %c0_16 = arith.constant 0 : index
    %20 = vector.load %arg5[%c0_15, %c0_16] : memref<1x128xf32, #tpu.memory_space<vmem>>, vector<1x128xf32>
    %21 = vector.broadcast %20 : vector<1x128xf32> to vector<4x128xf32>
    %22 = arith.addf %19, %21 : vector<4x128xf32>
    %c0_17 = arith.constant 0 : index
    %c0_18 = arith.constant 0 : index
    %23 = vector.load %arg12[%c0_17, %c0_18] : memref<4x128xf32, #tpu.memory_space<vmem>>, vector<4x128xf32>
    tpu.vector_store %arg12[%c0_17, %c0_18], %22 {strides = array<i32>} : memref<4x128xf32, #tpu.memory_space<vmem>>, vector<4x128xf32>,
    %24 = arith.mulf %8, %8 : vector<2x128xf32>
    %cst_19 = arith.constant dense<0.000000e+00> : vector<2xf32>
    %25 = vector.multi_reduction <add>, %24, %cst_19 [1] : vector<2x128xf32> to vector<2xf32>
    %26 = vector.shape_cast %25 : vector<2xf32> to vector<2x1xf32>
    %cst_20 = arith.constant 1.000000e-24 : f32
    %27 = vector.broadcast %cst_20 : f32 to vector<2x1xf32>
    %28 = arith.maximumf %26, %27 : vector<2x1xf32>
    %29 = math.rsqrt %28 : vector<2x1xf32>
    %30 = vector.broadcast %29 : vector<2x1xf32> to vector<2x128xf32>
    %31 = arith.mulf %8, %30 : vector<2x128xf32>
    %c0_21 = arith.constant 0 : index
    %c0_22 = arith.constant 0 : index
    %32 = vector.load %arg15[%c0_21, %c0_22] : memref<2x128xf32, #tpu.memory_space<vmem>>, vector<2x128xf32>
    tpu.vector_store %arg15[%c0_21, %c0_22], %31 {strides = array<i32>} : memref<2x128xf32, #tpu.memory_space<vmem>>, vector<2x128xf32>,
    %33 = arith.mulf %11, %11 : vector<6x128xf32>
    %cst_23 = arith.constant dense<0.000000e+00> : vector<6xf32>
    %34 = vector.multi_reduction <add>, %33, %cst_23 [1] : vector<6x128xf32> to vector<6xf32>
    %35 = vector.shape_cast %34 : vector<6xf32> to vector<6x1xf32>
    %cst_24 = arith.constant 1.000000e-24 : f32
    %36 = vector.broadcast %cst_24 : f32 to vector<6x1xf32>
    %37 = arith.maximumf %35, %36 : vector<6x1xf32>
    %38 = math.rsqrt %37 : vector<6x1xf32>
    %39 = vector.broadcast %38 : vector<6x1xf32> to vector<6x128xf32>
    %40 = arith.mulf %11, %39 : vector<6x128xf32>
    %c0_25 = arith.constant 0 : index
    %c0_26 = arith.constant 0 : index
    %41 = vector.load %arg17[%c0_25, %c0_26] : memref<6x128xf32, #tpu.memory_space<vmem>>, vector<6x128xf32>
    tpu.vector_store %arg17[%c0_25, %c0_26], %40 {strides = array<i32>} : memref<6x128xf32, #tpu.memory_space<vmem>>, vector<6x128xf32>,
    %42 = vector.extract_strided_slice %6 {offsets = [6, 0], sizes = [2, 128], strides = [1, 1]} : vector<12x128xf32> to vector<2x128xf32>
    %c0_27 = arith.constant 0 : index
    %c0_28 = arith.constant 0 : index
    %c0_29 = arith.constant 0 : index
    %43 = vector.load %arg8[%c0_27, %c0_28, %c0_29] : memref<3x128x128xf32, #tpu.memory_space<vmem>>, vector<1x128x128xf32>
    %44 = vector.shape_cast %43 : vector<1x128x128xf32> to vector<128x128xf32>
    %cst_30 = arith.constant dense<0.000000e+00> : vector<2x128xf32>
    %45 = tpu.matmul %42, %44, %cst_30 {dimension_numbers = #tpu.dot_dimension_numbers<[1], [0], [0], [1], [0, 0, 1, 1], [], []>} : vector<2x128xf32>, vector<128x128xf32>, vector<2x128xf32> -> vector<2x128xf32>
    %c0_31 = arith.constant 0 : index
    %c0_32 = arith.constant 0 : index
    %46 = vector.load %arg9[%c0_31, %c0_32] : memref<1x128xf32, #tpu.memory_space<vmem>>, vector<1x128xf32>
    %47 = vector.broadcast %46 : vector<1x128xf32> to vector<2x128xf32>
    %48 = arith.addf %45, %47 : vector<2x128xf32>
    %49 = vector.extract_strided_slice %6 {offsets = [8, 0], sizes = [2, 128], strides = [1, 1]} : vector<12x128xf32> to vector<2x128xf32>
    %c1 = arith.constant 1 : index
    %c0_33 = arith.constant 0 : index
    %c0_34 = arith.constant 0 : index
    %50 = vector.load %arg8[%c1, %c0_33, %c0_34] : memref<3x128x128xf32, #tpu.memory_space<vmem>>, vector<1x128x128xf32>
    %51 = vector.shape_cast %50 : vector<1x128x128xf32> to vector<128x128xf32>
    %cst_35 = arith.constant dense<0.000000e+00> : vector<2x128xf32>
    %52 = tpu.matmul %49, %51, %cst_35 {dimension_numbers = #tpu.dot_dimension_numbers<[1], [0], [0], [1], [0, 0, 1, 1], [], []>} : vector<2x128xf32>, vector<128x128xf32>, vector<2x128xf32> -> vector<2x128xf32>
    %53 = arith.addf %48, %52 : vector<2x128xf32>
    %54 = vector.extract_strided_slice %6 {offsets = [10, 0], sizes = [2, 128], strides = [1, 1]} : vector<12x128xf32> to vector<2x128xf32>
    %c2 = arith.constant 2 : index
    %c0_36 = arith.constant 0 : index
    %c0_37 = arith.constant 0 : index
    %55 = vector.load %arg8[%c2, %c0_36, %c0_37] : memref<3x128x128xf32, #tpu.memory_space<vmem>>, vector<1x128x128xf32>
    %56 = vector.shape_cast %55 : vector<1x128x128xf32> to vector<128x128xf32>
    %cst_38 = arith.constant dense<0.000000e+00> : vector<2x128xf32>
    %57 = tpu.matmul %54, %56, %cst_38 {dimension_numbers = #tpu.dot_dimension_numbers<[1], [0], [0], [1], [0, 0, 1, 1], [], []>} : vector<2x128xf32>, vector<128x128xf32>, vector<2x128xf32> -> vector<2x128xf32>
    %58 = arith.addf %53, %57 : vector<2x128xf32>
    %59 = arith.mulf %58, %58 : vector<2x128xf32>
    %cst_39 = arith.constant dense<0.000000e+00> : vector<2xf32>
    %60 = vector.multi_reduction <add>, %59, %cst_39 [1] : vector<2x128xf32> to vector<2xf32>
    %61 = vector.shape_cast %60 : vector<2xf32> to vector<2x1xf32>
    %cst_40 = arith.constant 1.000000e-24 : f32
    %62 = vector.broadcast %cst_40 : f32 to vector<2x1xf32>
    %63 = arith.maximumf %61, %62 : vector<2x1xf32>
    %64 = math.rsqrt %63 : vector<2x1xf32>
    %65 = vector.broadcast %64 : vector<2x1xf32> to vector<2x128xf32>
    %66 = arith.mulf %58, %65 : vector<2x128xf32>
    %c0_41 = arith.constant 0 : index
    %c0_42 = arith.constant 0 : index
    %67 = vector.load %arg14[%c0_41, %c0_42] : memref<2x128xf32, #tpu.memory_space<vmem>>, vector<2x128xf32>
    tpu.vector_store %arg14[%c0_41, %c0_42], %66 {strides = array<i32>} : memref<2x128xf32, #tpu.memory_space<vmem>>, vector<2x128xf32>,
    %c0_43 = arith.constant 0 : index
    %c0_44 = arith.constant 0 : index
    %68 = vector.load %arg10[%c0_43, %c0_44] : memref<128x128xf32, #tpu.memory_space<vmem>>, vector<128x128xf32>
    %cst_45 = arith.constant dense<0.000000e+00> : vector<2x128xf32>
    %69 = tpu.matmul %9, %68, %cst_45 {dimension_numbers = #tpu.dot_dimension_numbers<[1], [0], [0], [1], [0, 0, 1, 1], [], []>} : vector<2x128xf32>, vector<128x128xf32>, vector<2x128xf32> -> vector<2x128xf32>
    %c0_46 = arith.constant 0 : index
    %c0_47 = arith.constant 0 : index
    %70 = vector.load %arg11[%c0_46, %c0_47] : memref<1x128xf32, #tpu.memory_space<vmem>>, vector<1x128xf32>
    %71 = vector.broadcast %70 : vector<1x128xf32> to vector<2x128xf32>
    %72 = arith.addf %69, %71 : vector<2x128xf32>
    %73 = arith.mulf %72, %72 : vector<2x128xf32>
    %cst_48 = arith.constant dense<0.000000e+00> : vector<2xf32>
    %74 = vector.multi_reduction <add>, %73, %cst_48 [1] : vector<2x128xf32> to vector<2xf32>
    %75 = vector.shape_cast %74 : vector<2xf32> to vector<2x1xf32>
    %cst_49 = arith.constant 1.000000e-24 : f32
    %76 = vector.broadcast %cst_49 : f32 to vector<2x1xf32>
    %77 = arith.maximumf %75, %76 : vector<2x1xf32>
    %78 = math.rsqrt %77 : vector<2x1xf32>
    %79 = vector.broadcast %78 : vector<2x1xf32> to vector<2x128xf32>
    %80 = arith.mulf %72, %79 : vector<2x128xf32>
    %c0_50 = arith.constant 0 : index
    %c0_51 = arith.constant 0 : index
    %81 = vector.load %arg16[%c0_50, %c0_51] : memref<2x128xf32, #tpu.memory_space<vmem>>, vector<2x128xf32>
    tpu.vector_store %arg16[%c0_50, %c0_51], %80 {strides = array<i32>} : memref<2x128xf32, #tpu.memory_space<vmem>>, vector<2x128xf32>,
    return
  }
  func.func @transform_0(%arg0: i32) -> (i32, i32) {
    %c0_i32 = arith.constant 0 : i32
    %c0_i32_0 = arith.constant 0 : i32
    %c0_i32_1 = arith.constant 0 : i32
    return %c0_i32, %c0_i32_0 : i32, i32
  }
  func.func @transform_1(%arg0: i32) -> (i32, i32) {
    %c0_i32 = arith.constant 0 : i32
    %c0_i32_0 = arith.constant 0 : i32
    %c0_i32_1 = arith.constant 0 : i32
    return %c0_i32, %c0_i32_0 : i32, i32
  }
  func.func @transform_2(%arg0: i32) -> (i32, i32) {
    %c0_i32 = arith.constant 0 : i32
    %c0_i32_0 = arith.constant 0 : i32
    %c0_i32_1 = arith.constant 0 : i32
    return %c0_i32, %c0_i32_0 : i32, i32
  }
  func.func @transform_3(%arg0: i32) -> (i32, i32) {
    %c0_i32 = arith.constant 0 : i32
    %c0_i32_0 = arith.constant 0 : i32
    %c0_i32_1 = arith.constant 0 : i32
    return %c0_i32, %c0_i32_0 : i32, i32
  }
  func.func @transform_4(%arg0: i32) -> (i32, i32) {
    %c0_i32 = arith.constant 0 : i32
    %c0_i32_0 = arith.constant 0 : i32
    %c0_i32_1 = arith.constant 0 : i32
    return %c0_i32, %c0_i32_0 : i32, i32
  }
  func.func @transform_5(%arg0: i32) -> (i32, i32) {
    %c0_i32 = arith.constant 0 : i32
    %c0_i32_0 = arith.constant 0 : i32
    %c0_i32_1 = arith.constant 0 : i32
    return %c0_i32, %c0_i32_0 : i32, i32
  }
  func.func @transform_6(%arg0: i32) -> (i32, i32) {
    %c0_i32 = arith.constant 0 : i32
    %c0_i32_0 = arith.constant 0 : i32
    %c0_i32_1 = arith.constant 0 : i32
    return %c0_i32, %c0_i32_0 : i32, i32
  }
  func.func @transform_7(%arg0: i32) -> (i32, i32, i32) {
    %c0_i32 = arith.constant 0 : i32
    %c0_i32_0 = arith.constant 0 : i32
    %c0_i32_1 = arith.constant 0 : i32
    %c0_i32_2 = arith.constant 0 : i32
    return %c0_i32, %c0_i32_0, %c0_i32_1 : i32, i32, i32
  }
  func.func @transform_8(%arg0: i32) -> (i32, i32) {
    %c0_i32 = arith.constant 0 : i32
    %c0_i32_0 = arith.constant 0 : i32
    %c0_i32_1 = arith.constant 0 : i32
    return %c0_i32, %c0_i32_0 : i32, i32
  }
  func.func @transform_9(%arg0: i32) -> (i32, i32) {
    %c0_i32 = arith.constant 0 : i32
    %c0_i32_0 = arith.constant 0 : i32
    %c0_i32_1 = arith.constant 0 : i32
    return %c0_i32, %c0_i32_0 : i32, i32
  }
  func.func @transform_10(%arg0: i32) -> (i32, i32) {
    %c0_i32 = arith.constant 0 : i32
    %c0_i32_0 = arith.constant 0 : i32
    %c0_i32_1 = arith.constant 0 : i32
    return %c0_i32, %c0_i32_0 : i32, i32
  }
  func.func @transform_11(%arg0: i32) -> (i32, i32) {
    %c0_i32 = arith.constant 0 : i32
    %c0_i32_0 = arith.constant 0 : i32
    %c0_i32_1 = arith.constant 0 : i32
    return %c0_i32, %c0_i32_0 : i32, i32
  }
  func.func @transform_12(%arg0: i32) -> (i32, i32) {
    %c0_i32 = arith.constant 0 : i32
    %c0_i32_0 = arith.constant 0 : i32
    %c0_i32_1 = arith.constant 0 : i32
    return %c0_i32, %c0_i32_0 : i32, i32
  }
  func.func @transform_13(%arg0: i32) -> (i32, i32) {
    %c0_i32 = arith.constant 0 : i32
    %c0_i32_0 = arith.constant 0 : i32
    %c0_i32_1 = arith.constant 0 : i32
    return %c0_i32, %c0_i32_0 : i32, i32
  }
  func.func @transform_14(%arg0: i32) -> (i32, i32) {
    %c0_i32 = arith.constant 0 : i32
    %c0_i32_0 = arith.constant 0 : i32
    %c0_i32_1 = arith.constant 0 : i32
    return %c0_i32, %c0_i32_0 : i32, i32
  }
  func.func @transform_15(%arg0: i32) -> (i32, i32) {
    %c0_i32 = arith.constant 0 : i32
    %c0_i32_0 = arith.constant 0 : i32
    %c0_i32_1 = arith.constant 0 : i32
    return %c0_i32, %c0_i32_0 : i32, i32
  }
  func.func @transform_16(%arg0: i32) -> (i32, i32) {
    %c0_i32 = arith.constant 0 : i32
    %c0_i32_0 = arith.constant 0 : i32
    %c0_i32_1 = arith.constant 0 : i32
    return %c0_i32, %c0_i32_0 : i32, i32
  }
}

</mosaic_0001>

<llo_original>
// kernel: adamv2_forward.1
$region0: #{adamv2_forward.1}
  #allocation0 [shape = 'u32[]', space=smem, size = 0x4, offset = 0x4, fixed_abs, tag = 'smem constant byte address 0x4 - core index']
  #allocation1 [shape = 'u32[72,128]{1,0:T(1,128)}', space=vmem, size = 0x9000, scoped, tag = 'internal scratch']
  %s0 = inlined_call_operand.vmem [shape: f32[12,1024], index: 0, kind: input, shape index: {}]
  %s1 = inlined_call_operand.vmem [shape: f32[1024,256], index: 1, kind: input, shape index: {}]
  %s2 = inlined_call_operand.vmem [shape: f32[1,256], index: 2, kind: input, shape index: {}]
  %s3 = inlined_call_operand.vmem [shape: f32[128,128], index: 3, kind: input, shape index: {}]
  %s4 = inlined_call_operand.vmem [shape: f32[1,128], index: 4, kind: input, shape index: {}]
  %s5 = inlined_call_operand.vmem [shape: f32[128,128], index: 5, kind: input, shape index: {}]
  %s6 = inlined_call_operand.vmem [shape: f32[1,128], index: 6, kind: input, shape index: {}]
  %s7 = inlined_call_operand.vmem [shape: f32[3,128,128], index: 7, kind: input, shape index: {}]
  %s8 = inlined_call_operand.vmem [shape: f32[1,128], index: 8, kind: input, shape index: {}]
  %s9 = inlined_call_operand.vmem [shape: f32[128,128], index: 9, kind: input, shape index: {}]
  %s10 = inlined_call_operand.vmem [shape: f32[1,128], index: 10, kind: input, shape index: {}]
  %s11 = inlined_call_operand.hbm [shape: f32[4,128], index: 11, kind: output, shape index: {0}]
  %s12 = inlined_call_operand.hbm [shape: f32[2,128], index: 12, kind: output, shape index: {1}]
  %s13 = inlined_call_operand.hbm [shape: f32[2,128], index: 13, kind: output, shape index: {2}]
  %s14 = inlined_call_operand.hbm [shape: f32[2,128], index: 14, kind: output, shape index: {3}]
  %s15 = inlined_call_operand.hbm [shape: f32[2,128], index: 15, kind: output, shape index: {4}]
  %s16 = inlined_call_operand.vmem [shape: f32[6,128], index: 16, kind: output, shape index: {5}]
  %17 = xla_tuple %s11, %s12, %s13, %s14, %s15, %s16
  %s18 = sld [smem:[#allocation0]]
  $region94: #{adamv2_forward.1} parent=0
    _
  %s20 = ssub.s32 1, %s18
  %s21 = scalar_select 0, %s20, %s18
  $region1: #{adamv2_forward.1} parent=0
    #allocation2 [shape = 'u8[2048]{0}', space=vmem, size = 0x800, scoped, tag = 'output window, operand 0, single buffered']
    #allocation3 [shape = 's32[1]{0}', space=sflag, size = 0x4, scoped, tag = 'scoped memory for adamv2_forward.1']
    #allocation4 [shape = 'u8[1024]{0}', space=vmem, size = 0x400, scoped, tag = 'output window, operand 1, single buffered']
    #allocation5 [shape = 's32[1]{0}', space=sflag, size = 0x4, scoped, tag = 'scoped memory for adamv2_forward.1']
    #allocation6 [shape = 'u8[1024]{0}', space=vmem, size = 0x400, scoped, tag = 'output window, operand 2, single buffered']
    #allocation7 [shape = 'u8[1024]{0}', space=vmem, size = 0x400, scoped, tag = 'output window, operand 3, single buffered']
    #allocation8 [shape = 's32[1]{0}', space=sflag, size = 0x4, scoped, tag = 'scoped memory for adamv2_forward.1']
    #allocation9 [shape = 'u8[1024]{0}', space=vmem, size = 0x400, scoped, tag = 'output window, operand 4, single buffered']
    %22 = vsyncpa [#allocation3], 0
    %23 = vsyncpa [#allocation5], 0
    %24 = vsyncpa [#allocation8], 0
    // Predicated region
    $region2: #{adamv2_forward.1} parent=1 // pred_check
      _
    $region3: #{adamv2_forward.1} parent=1 // pred_check_branch
      %26 = sbr.rel (0) target = $region5
    $region4: #{adamv2_forward.1} parent=1 // pred_region
      _
    $region5: #{adamv2_forward.1} parent=1 // pred_fallthru
      _
    // Predicated region
    $region6: #{adamv2_forward.1} parent=1 // pred_check
      _
    $region7: #{adamv2_forward.1} parent=1 // pred_check_branch
      %28 = sbr.rel (0) target = $region9
    $region8: #{adamv2_forward.1} parent=1 // pred_region
      _
    $region9: #{adamv2_forward.1} parent=1 // pred_fallthru
      _
    // Predicated region
    $region10: #{adamv2_forward.1} parent=1 // pred_check
      _
    $region11: #{adamv2_forward.1} parent=1 // pred_check_branch
      %30 = sbr.rel (0) target = $region13
    $region12: #{adamv2_forward.1} parent=1 // pred_region
      _
    $region13: #{adamv2_forward.1} parent=1 // pred_fallthru
      _
    // Predicated region
    $region14: #{adamv2_forward.1} parent=1 // pred_check
      _
    $region15: #{adamv2_forward.1} parent=1 // pred_check_branch
      %32 = sbr.rel (0) target = $region17
    $region16: #{adamv2_forward.1} parent=1 // pred_region
      _
    $region17: #{adamv2_forward.1} parent=1 // pred_fallthru
      _
    // Predicated region
    $region18: #{adamv2_forward.1} parent=1 // pred_check
      _
    $region19: #{adamv2_forward.1} parent=1 // pred_check_branch
      %34 = sbr.rel (0) target = $region21
    $region20: #{adamv2_forward.1} parent=1 // pred_region
      _
    $region21: #{adamv2_forward.1} parent=1 // pred_fallthru
      _
    // Predicated region
    $region22: #{adamv2_forward.1} parent=1 // pred_check
      _
    $region23: #{adamv2_forward.1} parent=1 // pred_check_branch
      %36 = sbr.rel (0) target = $region25
    $region24: #{adamv2_forward.1} parent=1 // pred_region
      _
    $region25: #{adamv2_forward.1} parent=1 // pred_fallthru
      _
    // Predicated region
    $region26: #{adamv2_forward.1} parent=1 // pred_check
      _
    $region27: #{adamv2_forward.1} parent=1 // pred_check_branch
      %38 = sbr.rel (0) target = $region29
    $region28: #{adamv2_forward.1} parent=1 // pred_region
      _
    $region29: #{adamv2_forward.1} parent=1 // pred_fallthru
      _
    // Predicated region
    $region30: #{adamv2_forward.1} parent=1 // pred_check
      _
    $region31: #{adamv2_forward.1} parent=1 // pred_check_branch
      %40 = sbr.rel (0) target = $region33
    $region32: #{adamv2_forward.1} parent=1 // pred_region
      _
    $region33: #{adamv2_forward.1} parent=1 // pred_fallthru
      _
    // Predicated region
    $region34: #{adamv2_forward.1} parent=1 // pred_check
      _
    $region35: #{adamv2_forward.1} parent=1 // pred_check_branch
      %42 = sbr.rel (0) target = $region37
    $region36: #{adamv2_forward.1} parent=1 // pred_region
      _
    $region37: #{adamv2_forward.1} parent=1 // pred_fallthru
      _
    // Predicated region
    $region38: #{adamv2_forward.1} parent=1 // pred_check
      _
    $region39: #{adamv2_forward.1} parent=1 // pred_check_branch
      %44 = sbr.rel (0) target = $region41
    $region40: #{adamv2_forward.1} parent=1 // pred_region
      _
    $region41: #{adamv2_forward.1} parent=1 // pred_fallthru
      _
    // Predicated region
    $region42: #{adamv2_forward.1} parent=1 // pred_check
      _
    $region43: #{adamv2_forward.1} parent=1 // pred_check_branch
      %46 = sbr.rel (0) target = $region45
    $region44: #{adamv2_forward.1} parent=1 // pred_region
      _
    $region45: #{adamv2_forward.1} parent=1 // pred_fallthru
      _
    %v47 = vld [vmem:[%s0] sm:$0xff]
    %v48 = vld [vmem:[%s0 + $0x8] sm:$0xff]
    %v49 = vld [vmem:[%s0 + $0x10] sm:$0xff]
    %v50 = vld [vmem:[%s0 + $0x18] sm:$0xff]
    %v51 = vld [vmem:[%s0 + $0x20] sm:$0xff]
    %v52 = vld [vmem:[%s0 + $0x28] sm:$0xff]
    %v53 = vld [vmem:[%s0 + $0x30] sm:$0xff]
    %v54 = vld [vmem:[%s0 + $0x38] sm:$0xff]
    %v55 = vld [vmem:[%s0 + $0x40] sm:$0xf]
    %v56 = vld [vmem:[%s0 + $0x48] sm:$0xf]
    %v57 = vld [vmem:[%s0 + $0x50] sm:$0xf]
    %v58 = vld [vmem:[%s0 + $0x58] sm:$0xf]
    %v59 = vld [vmem:[%s0 + $0x60] sm:$0xf]
    %v60 = vld [vmem:[%s0 + $0x68] sm:$0xf]
    %v61 = vld [vmem:[%s0 + $0x70] sm:$0xf]
    %v62 = vld [vmem:[%s0 + $0x78] sm:$0xf]
    %v63 = vld [vmem:[%s1] sm:$0xff]
    %v64 = vld [vmem:[%s1 + $0x8] sm:$0xff]
    %v65 = vld [vmem:[%s1 + $0x10] sm:$0xff]
    %v66 = vld [vmem:[%s1 + $0x18] sm:$0xff]
    %v67 = vld [vmem:[%s1 + $0x20] sm:$0xff]
    %v68 = vld [vmem:[%s1 + $0x28] sm:$0xff]
    %v69 = vld [vmem:[%s1 + $0x30] sm:$0xff]
    %v70 = vld [vmem:[%s1 + $0x38] sm:$0xff]
    %v71 = vld [vmem:[%s1 + $0x40] sm:$0xff]
    %v72 = vld [vmem:[%s1 + $0x48] sm:$0xff]
    %v73 = vld [vmem:[%s1 + $0x50] sm:$0xff]
    %v74 = vld [vmem:[%s1 + $0x58] sm:$0xff]
    %v75 = vld [vmem:[%s1 + $0x60] sm:$0xff]
    %v76 = vld [vmem:[%s1 + $0x68] sm:$0xff]
    %v77 = vld [vmem:[%s1 + $0x70] sm:$0xff]
    %v78 = vld [vmem:[%s1 + $0x78] sm:$0xff]
    %v79 = vld [vmem:[%s1 + $0x80] sm:$0xff]
    %v80 = vld [vmem:[%s1 + $0x88] sm:$0xff]
    %v81 = vld [vmem:[%s1 + $0x90] sm:$0xff]
    %v82 = vld [vmem:[%s1 + $0x98] sm:$0xff]
    %v83 = vld [vmem:[%s1 + $0xa0] sm:$0xff]
    %v84 = vld [vmem:[%s1 + $0xa8] sm:$0xff]
    %v85 = vld [vmem:[%s1 + $0xb0] sm:$0xff]
    %v86 = vld [vmem:[%s1 + $0xb8] sm:$0xff]
    %v87 = vld [vmem:[%s1 + $0xc0] sm:$0xff]
    %v88 = vld [vmem:[%s1 + $0xc8] sm:$0xff]
    %v89 = vld [vmem:[%s1 + $0xd0] sm:$0xff]
    %v90 = vld [vmem:[%s1 + $0xd8] sm:$0xff]
    %v91 = vld [vmem:[%s1 + $0xe0] sm:$0xff]
    %v92 = vld [vmem:[%s1 + $0xe8] sm:$0xff]
    %v93 = vld [vmem:[%s1 + $0xf0] sm:$0xff]
    %v94 = vld [vmem:[%s1 + $0xf8] sm:$0xff]
    %v95 = vld [vmem:[%s1 + $0x100] sm:$0xff]
    %v96 = vld [vmem:[%s1 + $0x108] sm:$0xff]
    %v97 = vld [vmem:[%s1 + $0x110] sm:$0xff]
    %v98 = vld [vmem:[%s1 + $0x118] sm:$0xff]
    %v99 = vld [vmem:[%s1 + $0x120] sm:$0xff]
    %v100 = vld [vmem:[%s1 + $0x128] sm:$0xff]
    %v101 = vld [vmem:[%s1 + $0x130] sm:$0xff]
    %v102 = vld [vmem:[%s1 + $0x138] sm:$0xff]
    %v103 = vld [vmem:[%s1 + $0x140] sm:$0xff]
    %v104 = vld [vmem:[%s1 + $0x148] sm:$0xff]
    %v105 = vld [vmem:[%s1 + $0x150] sm:$0xff]
    %v106 = vld [vmem:[%s1 + $0x158] sm:$0xff]
    %v107 = vld [vmem:[%s1 + $0x160] sm:$0xff]
    %v108 = vld [vmem:[%s1 + $0x168] sm:$0xff]
    %v109 = vld [vmem:[%s1 + $0x170] sm:$0xff]
    %v110 = vld [vmem:[%s1 + $0x178] sm:$0xff]
    %v111 = vld [vmem:[%s1 + $0x180] sm:$0xff]
    %v112 = vld [vmem:[%s1 + $0x188] sm:$0xff]
    %v113 = vld [vmem:[%s1 + $0x190] sm:$0xff]
    %v114 = vld [vmem:[%s1 + $0x198] sm:$0xff]
    %v115 = vld [vmem:[%s1 + $0x1a0] sm:$0xff]
    %v116 = vld [vmem:[%s1 + $0x1a8] sm:$0xff]
    %v117 = vld [vmem:[%s1 + $0x1b0] sm:$0xff]
    %v118 = vld [vmem:[%s1 + $0x1b8] sm:$0xff]
    %v119 = vld [vmem:[%s1 + $0x1c0] sm:$0xff]
    %v120 = vld [vmem:[%s1 + $0x1c8] sm:$0xff]
    %v121 = vld [vmem:[%s1 + $0x1d0] sm:$0xff]
    %v122 = vld [vmem:[%s1 + $0x1d8] sm:$0xff]
    %v123 = vld [vmem:[%s1 + $0x1e0] sm:$0xff]
    %v124 = vld [vmem:[%s1 + $0x1e8] sm:$0xff]
    %v125 = vld [vmem:[%s1 + $0x1f0] sm:$0xff]
    %v126 = vld [vmem:[%s1 + $0x1f8] sm:$0xff]
    %v127 = vld [vmem:[%s1 + $0x200] sm:$0xff]
    %v128 = vld [vmem:[%s1 + $0x208] sm:$0xff]
    %v129 = vld [vmem:[%s1 + $0x210] sm:$0xff]
    %v130 = vld [vmem:[%s1 + $0x218] sm:$0xff]
    %v131 = vld [vmem:[%s1 + $0x220] sm:$0xff]
    %v132 = vld [vmem:[%s1 + $0x228] sm:$0xff]
    %v133 = vld [vmem:[%s1 + $0x230] sm:$0xff]
    %v134 = vld [vmem:[%s1 + $0x238] sm:$0xff]
    %v135 = vld [vmem:[%s1 + $0x240] sm:$0xff]
    %v136 = vld [vmem:[%s1 + $0x248] sm:$0xff]
    %v137 = vld [vmem:[%s1 + $0x250] sm:$0xff]
    %v138 = vld [vmem:[%s1 + $0x258] sm:$0xff]
    %v139 = vld [vmem:[%s1 + $0x260] sm:$0xff]
    %v140 = vld [vmem:[%s1 + $0x268] sm:$0xff]
    %v141 = vld [vmem:[%s1 + $0x270] sm:$0xff]
    %v142 = vld [vmem:[%s1 + $0x278] sm:$0xff]
    %v143 = vld [vmem:[%s1 + $0x280] sm:$0xff]
    %v144 = vld [vmem:[%s1 + $0x288] sm:$0xff]
    %v145 = vld [vmem:[%s1 + $0x290] sm:$0xff]
    %v146 = vld [vmem:[%s1 + $0x298] sm:$0xff]
    %v147 = vld [vmem:[%s1 + $0x2a0] sm:$0xff]
    %v148 = vld [vmem:[%s1 + $0x2a8] sm:$0xff]
    %v149 = vld [vmem:[%s1 + $0x2b0] sm:$0xff]
    %v150 = vld [vmem:[%s1 + $0x2b8] sm:$0xff]
    %v151 = vld [vmem:[%s1 + $0x2c0] sm:$0xff]
    %v152 = vld [vmem:[%s1 + $0x2c8] sm:$0xff]
    %v153 = vld [vmem:[%s1 + $0x2d0] sm:$0xff]
    %v154 = vld [vmem:[%s1 + $0x2d8] sm:$0xff]
    %v155 = vld [vmem:[%s1 + $0x2e0] sm:$0xff]
    %v156 = vld [vmem:[%s1 + $0x2e8] sm:$0xff]
    %v157 = vld [vmem:[%s1 + $0x2f0] sm:$0xff]
    %v158 = vld [vmem:[%s1 + $0x2f8] sm:$0xff]
    %v159 = vld [vmem:[%s1 + $0x300] sm:$0xff]
    %v160 = vld [vmem:[%s1 + $0x308] sm:$0xff]
    %v161 = vld [vmem:[%s1 + $0x310] sm:$0xff]
    %v162 = vld [vmem:[%s1 + $0x318] sm:$0xff]
    %v163 = vld [vmem:[%s1 + $0x320] sm:$0xff]
    %v164 = vld [vmem:[%s1 + $0x328] sm:$0xff]
    %v165 = vld [vmem:[%s1 + $0x330] sm:$0xff]
    %v166 = vld [vmem:[%s1 + $0x338] sm:$0xff]
    %v167 = vld [vmem:[%s1 + $0x340] sm:$0xff]
    %v168 = vld [vmem:[%s1 + $0x348] sm:$0xff]
    %v169 = vld [vmem:[%s1 + $0x350] sm:$0xff]
    %v170 = vld [vmem:[%s1 + $0x358] sm:$0xff]
    %v171 = vld [vmem:[%s1 + $0x360] sm:$0xff]
    %v172 = vld [vmem:[%s1 + $0x368] sm:$0xff]
    %v173 = vld [vmem:[%s1 + $0x370] sm:$0xff]
    %v174 = vld [vmem:[%s1 + $0x378] sm:$0xff]
    %v175 = vld [vmem:[%s1 + $0x380] sm:$0xff]
    %v176 = vld [vmem:[%s1 + $0x388] sm:$0xff]
    %v177 = vld [vmem:[%s1 + $0x390] sm:$0xff]
    %v178 = vld [vmem:[%s1 + $0x398] sm:$0xff]
    %v179 = vld [vmem:[%s1 + $0x3a0] sm:$0xff]
    %v180 = vld [vmem:[%s1 + $0x3a8] sm:$0xff]
    %v181 = vld [vmem:[%s1 + $0x3b0] sm:$0xff]
    %v182 = vld [vmem:[%s1 + $0x3b8] sm:$0xff]
    %v183 = vld [vmem:[%s1 + $0x3c0] sm:$0xff]
    %v184 = vld [vmem:[%s1 + $0x3c8] sm:$0xff]
    %v185 = vld [vmem:[%s1 + $0x3d0] sm:$0xff]
    %v186 = vld [vmem:[%s1 + $0x3d8] sm:$0xff]
    %v187 = vld [vmem:[%s1 + $0x3e0] sm:$0xff]
    %v188 = vld [vmem:[%s1 + $0x3e8] sm:$0xff]
    %v189 = vld [vmem:[%s1 + $0x3f0] sm:$0xff]
    %v190 = vld [vmem:[%s1 + $0x3f8] sm:$0xff]
    %v191 = vld [vmem:[%s1 + $0x400] sm:$0xff]
    %v192 = vld [vmem:[%s1 + $0x408] sm:$0xff]
    %v193 = vld [vmem:[%s1 + $0x410] sm:$0xff]
    %v194 = vld [vmem:[%s1 + $0x418] sm:$0xff]
    %v195 = vld [vmem:[%s1 + $0x420] sm:$0xff]
    %v196 = vld [vmem:[%s1 + $0x428] sm:$0xff]
    %v197 = vld [vmem:[%s1 + $0x430] sm:$0xff]
    %v198 = vld [vmem:[%s1 + $0x438] sm:$0xff]
    %v199 = vld [vmem:[%s1 + $0x440] sm:$0xff]
    %v200 = vld [vmem:[%s1 + $0x448] sm:$0xff]
    %v201 = vld [vmem:[%s1 + $0x450] sm:$0xff]
    %v202 = vld [vmem:[%s1 + $0x458] sm:$0xff]
    %v203 = vld [vmem:[%s1 + $0x460] sm:$0xff]
    %v204 = vld [vmem:[%s1 + $0x468] sm:$0xff]
    %v205 = vld [vmem:[%s1 + $0x470] sm:$0xff]
    %v206 = vld [vmem:[%s1 + $0x478] sm:$0xff]
    %v207 = vld [vmem:[%s1 + $0x480] sm:$0xff]
    %v208 = vld [vmem:[%s1 + $0x488] sm:$0xff]
    %v209 = vld [vmem:[%s1 + $0x490] sm:$0xff]
    %v210 = vld [vmem:[%s1 + $0x498] sm:$0xff]
    %v211 = vld [vmem:[%s1 + $0x4a0] sm:$0xff]
    %v212 = vld [vmem:[%s1 + $0x4a8] sm:$0xff]
    %v213 = vld [vmem:[%s1 + $0x4b0] sm:$0xff]
    %v214 = vld [vmem:[%s1 + $0x4b8] sm:$0xff]
    %v215 = vld [vmem:[%s1 + $0x4c0] sm:$0xff]
    %v216 = vld [vmem:[%s1 + $0x4c8] sm:$0xff]
    %v217 = vld [vmem:[%s1 + $0x4d0] sm:$0xff]
    %v218 = vld [vmem:[%s1 + $0x4d8] sm:$0xff]
    %v219 = vld [vmem:[%s1 + $0x4e0] sm:$0xff]
    %v220 = vld [vmem:[%s1 + $0x4e8] sm:$0xff]
    %v221 = vld [vmem:[%s1 + $0x4f0] sm:$0xff]
    %v222 = vld [vmem:[%s1 + $0x4f8] sm:$0xff]
    %v223 = vld [vmem:[%s1 + $0x500] sm:$0xff]
    %v224 = vld [vmem:[%s1 + $0x508] sm:$0xff]
    %v225 = vld [vmem:[%s1 + $0x510] sm:$0xff]
    %v226 = vld [vmem:[%s1 + $0x518] sm:$0xff]
    %v227 = vld [vmem:[%s1 + $0x520] sm:$0xff]
    %v228 = vld [vmem:[%s1 + $0x528] sm:$0xff]
    %v229 = vld [vmem:[%s1 + $0x530] sm:$0xff]
    %v230 = vld [vmem:[%s1 + $0x538] sm:$0xff]
    %v231 = vld [vmem:[%s1 + $0x540] sm:$0xff]
    %v232 = vld [vmem:[%s1 + $0x548] sm:$0xff]
    %v233 = vld [vmem:[%s1 + $0x550] sm:$0xff]
    %v234 = vld [vmem:[%s1 + $0x558] sm:$0xff]
    %v235 = vld [vmem:[%s1 + $0x560] sm:$0xff]
    %v236 = vld [vmem:[%s1 + $0x568] sm:$0xff]
    %v237 = vld [vmem:[%s1 + $0x570] sm:$0xff]
    %v238 = vld [vmem:[%s1 + $0x578] sm:$0xff]
    %v239 = vld [vmem:[%s1 + $0x580] sm:$0xff]
    %v240 = vld [vmem:[%s1 + $0x588] sm:$0xff]
    %v241 = vld [vmem:[%s1 + $0x590] sm:$0xff]
    %v242 = vld [vmem:[%s1 + $0x598] sm:$0xff]
    %v243 = vld [vmem:[%s1 + $0x5a0] sm:$0xff]
    %v244 = vld [vmem:[%s1 + $0x5a8] sm:$0xff]
    %v245 = vld [vmem:[%s1 + $0x5b0] sm:$0xff]
    %v246 = vld [vmem:[%s1 + $0x5b8] sm:$0xff]
    %v247 = vld [vmem:[%s1 + $0x5c0] sm:$0xff]
    %v248 = vld [vmem:[%s1 + $0x5c8] sm:$0xff]
    %v249 = vld [vmem:[%s1 + $0x5d0] sm:$0xff]
    %v250 = vld [vmem:[%s1 + $0x5d8] sm:$0xff]
    %v251 = vld [vmem:[%s1 + $0x5e0] sm:$0xff]
    %v252 = vld [vmem:[%s1 + $0x5e8] sm:$0xff]
    %v253 = vld [vmem:[%s1 + $0x5f0] sm:$0xff]
    %v254 = vld [vmem:[%s1 + $0x5f8] sm:$0xff]
    %v255 = vld [vmem:[%s1 + $0x600] sm:$0xff]
    %v256 = vld [vmem:[%s1 + $0x608] sm:$0xff]
    %v257 = vld [vmem:[%s1 + $0x610] sm:$0xff]
    %v258 = vld [vmem:[%s1 + $0x618] sm:$0xff]
    %v259 = vld [vmem:[%s1 + $0x620] sm:$0xff]
    %v260 = vld [vmem:[%s1 + $0x628] sm:$0xff]
    %v261 = vld [vmem:[%s1 + $0x630] sm:$0xff]
    %v262 = vld [vmem:[%s1 + $0x638] sm:$0xff]
    %v263 = vld [vmem:[%s1 + $0x640] sm:$0xff]
    %v264 = vld [vmem:[%s1 + $0x648] sm:$0xff]
    %v265 = vld [vmem:[%s1 + $0x650] sm:$0xff]
    %v266 = vld [vmem:[%s1 + $0x658] sm:$0xff]
    %v267 = vld [vmem:[%s1 + $0x660] sm:$0xff]
    %v268 = vld [vmem:[%s1 + $0x668] sm:$0xff]
    %v269 = vld [vmem:[%s1 + $0x670] sm:$0xff]
    %v270 = vld [vmem:[%s1 + $0x678] sm:$0xff]
    %v271 = vld [vmem:[%s1 + $0x680] sm:$0xff]
    %v272 = vld [vmem:[%s1 + $0x688] sm:$0xff]
    %v273 = vld [vmem:[%s1 + $0x690] sm:$0xff]
    %v274 = vld [vmem:[%s1 + $0x698] sm:$0xff]
    %v275 = vld [vmem:[%s1 + $0x6a0] sm:$0xff]
    %v276 = vld [vmem:[%s1 + $0x6a8] sm:$0xff]
    %v277 = vld [vmem:[%s1 + $0x6b0] sm:$0xff]
    %v278 = vld [vmem:[%s1 + $0x6b8] sm:$0xff]
    %v279 = vld [vmem:[%s1 + $0x6c0] sm:$0xff]
    %v280 = vld [vmem:[%s1 + $0x6c8] sm:$0xff]
    %v281 = vld [vmem:[%s1 + $0x6d0] sm:$0xff]
    %v282 = vld [vmem:[%s1 + $0x6d8] sm:$0xff]
    %v283 = vld [vmem:[%s1 + $0x6e0] sm:$0xff]
    %v284 = vld [vmem:[%s1 + $0x6e8] sm:$0xff]
    %v285 = vld [vmem:[%s1 + $0x6f0] sm:$0xff]
    %v286 = vld [vmem:[%s1 + $0x6f8] sm:$0xff]
    %v287 = vld [vmem:[%s1 + $0x700] sm:$0xff]
    %v288 = vld [vmem:[%s1 + $0x708] sm:$0xff]
    %v289 = vld [vmem:[%s1 + $0x710] sm:$0xff]
    %v290 = vld [vmem:[%s1 + $0x718] sm:$0xff]
    %v291 = vld [vmem:[%s1 + $0x720] sm:$0xff]
    %v292 = vld [vmem:[%s1 + $0x728] sm:$0xff]
    %v293 = vld [vmem:[%s1 + $0x730] sm:$0xff]
    %v294 = vld [vmem:[%s1 + $0x738] sm:$0xff]
    %v295 = vld [vmem:[%s1 + $0x740] sm:$0xff]
    %v296 = vld [vmem:[%s1 + $0x748] sm:$0xff]
    %v297 = vld [vmem:[%s1 + $0x750] sm:$0xff]
    %v298 = vld [vmem:[%s1 + $0x758] sm:$0xff]
    %v299 = vld [vmem:[%s1 + $0x760] sm:$0xff]
    %v300 = vld [vmem:[%s1 + $0x768] sm:$0xff]
    %v301 = vld [vmem:[%s1 + $0x770] sm:$0xff]
    %v302 = vld [vmem:[%s1 + $0x778] sm:$0xff]
    %v303 = vld [vmem:[%s1 + $0x780] sm:$0xff]
    %v304 = vld [vmem:[%s1 + $0x788] sm:$0xff]
    %v305 = vld [vmem:[%s1 + $0x790] sm:$0xff]
    %v306 = vld [vmem:[%s1 + $0x798] sm:$0xff]
    %v307 = vld [vmem:[%s1 + $0x7a0] sm:$0xff]
    %v308 = vld [vmem:[%s1 + $0x7a8] sm:$0xff]
    %v309 = vld [vmem:[%s1 + $0x7b0] sm:$0xff]
    %v310 = vld [vmem:[%s1 + $0x7b8] sm:$0xff]
    %v311 = vld [vmem:[%s1 + $0x7c0] sm:$0xff]
    %v312 = vld [vmem:[%s1 + $0x7c8] sm:$0xff]
    %v313 = vld [vmem:[%s1 + $0x7d0] sm:$0xff]
    %v314 = vld [vmem:[%s1 + $0x7d8] sm:$0xff]
    %v315 = vld [vmem:[%s1 + $0x7e0] sm:$0xff]
    %v316 = vld [vmem:[%s1 + $0x7e8] sm:$0xff]
    %v317 = vld [vmem:[%s1 + $0x7f0] sm:$0xff]
    %v318 = vld [vmem:[%s1 + $0x7f8] sm:$0xff]
    %v319 = vld [vmem:[%s2] sm:$0x3]
    %v321 = vperm.slane %v319, 0
    %v322 = vperm.slane %v319, 1
    %325 = vmatpush.msra.mxu0 %v93
    %326 = vmatpush.msra.mxu0 %v91
    %327 = vmatpush.msra.mxu0 %v89
    %328 = vmatpush.msra.mxu0 %v87
    %329 = vmatpush.msra.mxu0 %v85
    %330 = vmatpush.msra.mxu0 %v83
    %331 = vmatpush.msra.mxu0 %v81
    %332 = vmatpush.msra.mxu0 %v79
    %333 = vmatpush.msra.mxu0 %v77
    %334 = vmatpush.msra.mxu0 %v75
    %335 = vmatpush.msra.mxu0 %v73
    %336 = vmatpush.msra.mxu0 %v71
    %337 = vmatpush.msra.mxu0 %v69
    %338 = vmatpush.msra.mxu0 %v67
    %339 = vmatpush.msra.mxu0 %v65
    %340 = vmatpush.msra.mxu0 %v63
    %341 = vmatmul.f32.gmra.mxu0 %v47
    %v342 = vpop.f32.mrf.mxu0
    %v343 = vadd.f32 %v321, %v342
    %344 = vmatmul.f32.gmra.mxu0 %v55
    %v345 = vpop.f32.mrf.mxu0
    %v346 = vadd.f32 %v321, %v345
    %347 = vdwg.mxu0
    %348 = vmatpush.msra.mxu0 %v125
    %349 = vmatpush.msra.mxu0 %v123
    %350 = vmatpush.msra.mxu0 %v121
    %351 = vmatpush.msra.mxu0 %v119
    %352 = vmatpush.msra.mxu0 %v117
    %353 = vmatpush.msra.mxu0 %v115
    %354 = vmatpush.msra.mxu0 %v113
    %355 = vmatpush.msra.mxu0 %v111
    %356 = vmatpush.msra.mxu0 %v109
    %357 = vmatpush.msra.mxu0 %v107
    %358 = vmatpush.msra.mxu0 %v105
    %359 = vmatpush.msra.mxu0 %v103
    %360 = vmatpush.msra.mxu0 %v101
    %361 = vmatpush.msra.mxu0 %v99
    %362 = vmatpush.msra.mxu0 %v97
    %363 = vmatpush.msra.mxu0 %v95
    %364 = vmatmul.f32.gmra.mxu0 %v48
    %v365 = vpop.f32.mrf.mxu0
    %v366 = vadd.f32 %v343, %v365
    %367 = vmatmul.f32.gmra.mxu0 %v56
    %v368 = vpop.f32.mrf.mxu0
    %v369 = vadd.f32 %v346, %v368
    %370 = vdwg.mxu0
    %371 = vmatpush.msra.mxu0 %v157
    %372 = vmatpush.msra.mxu0 %v155
    %373 = vmatpush.msra.mxu0 %v153
    %374 = vmatpush.msra.mxu0 %v151
    %375 = vmatpush.msra.mxu0 %v149
    %376 = vmatpush.msra.mxu0 %v147
    %377 = vmatpush.msra.mxu0 %v145
    %378 = vmatpush.msra.mxu0 %v143
    %379 = vmatpush.msra.mxu0 %v141
    %380 = vmatpush.msra.mxu0 %v139
    %381 = vmatpush.msra.mxu0 %v137
    %382 = vmatpush.msra.mxu0 %v135
    %383 = vmatpush.msra.mxu0 %v133
    %384 = vmatpush.msra.mxu0 %v131
    %385 = vmatpush.msra.mxu0 %v129
    %386 = vmatpush.msra.mxu0 %v127
    %387 = vmatmul.f32.gmra.mxu0 %v49
    %v388 = vpop.f32.mrf.mxu0
    %v389 = vadd.f32 %v366, %v388
    %390 = vmatmul.f32.gmra.mxu0 %v57
    %v391 = vpop.f32.mrf.mxu0
    %v392 = vadd.f32 %v369, %v391
    %393 = vdwg.mxu0
    %394 = vmatpush.msra.mxu0 %v189
    %395 = vmatpush.msra.mxu0 %v187
    %396 = vmatpush.msra.mxu0 %v185
    %397 = vmatpush.msra.mxu0 %v183
    %398 = vmatpush.msra.mxu0 %v181
    %399 = vmatpush.msra.mxu0 %v179
    %400 = vmatpush.msra.mxu0 %v177
    %401 = vmatpush.msra.mxu0 %v175
    %402 = vmatpush.msra.mxu0 %v173
    %403 = vmatpush.msra.mxu0 %v171
    %404 = vmatpush.msra.mxu0 %v169
    %405 = vmatpush.msra.mxu0 %v167
    %406 = vmatpush.msra.mxu0 %v165
    %407 = vmatpush.msra.mxu0 %v163
    %408 = vmatpush.msra.mxu0 %v161
    %409 = vmatpush.msra.mxu0 %v159
    %410 = vmatmul.f32.gmra.mxu0 %v50
    %v411 = vpop.f32.mrf.mxu0
    %v412 = vadd.f32 %v389, %v411
    %413 = vmatmul.f32.gmra.mxu0 %v58
    %v414 = vpop.f32.mrf.mxu0
    %v415 = vadd.f32 %v392, %v414
    %416 = vdwg.mxu0
    %417 = vmatpush.msra.mxu0 %v221
    %418 = vmatpush.msra.mxu0 %v219
    %419 = vmatpush.msra.mxu0 %v217
    %420 = vmatpush.msra.mxu0 %v215
    %421 = vmatpush.msra.mxu0 %v213
    %422 = vmatpush.msra.mxu0 %v211
    %423 = vmatpush.msra.mxu0 %v209
    %424 = vmatpush.msra.mxu0 %v207
    %425 = vmatpush.msra.mxu0 %v205
    %426 = vmatpush.msra.mxu0 %v203
    %427 = vmatpush.msra.mxu0 %v201
    %428 = vmatpush.msra.mxu0 %v199
    %429 = vmatpush.msra.mxu0 %v197
    %430 = vmatpush.msra.mxu0 %v195
    %431 = vmatpush.msra.mxu0 %v193
    %432 = vmatpush.msra.mxu0 %v191
    %433 = vmatmul.f32.gmra.mxu0 %v51
    %v434 = vpop.f32.mrf.mxu0
    %v435 = vadd.f32 %v412, %v434
    %436 = vmatmul.f32.gmra.mxu0 %v59
    %v437 = vpop.f32.mrf.mxu0
    %v438 = vadd.f32 %v415, %v437
    %439 = vdwg.mxu0
    %440 = vmatpush.msra.mxu0 %v253
    %441 = vmatpush.msra.mxu0 %v251
    %442 = vmatpush.msra.mxu0 %v249
    %443 = vmatpush.msra.mxu0 %v247
    %444 = vmatpush.msra.mxu0 %v245
    %445 = vmatpush.msra.mxu0 %v243
    %446 = vmatpush.msra.mxu0 %v241
    %447 = vmatpush.msra.mxu0 %v239
    %448 = vmatpush.msra.mxu0 %v237
    %449 = vmatpush.msra.mxu0 %v235
    %450 = vmatpush.msra.mxu0 %v233
    %451 = vmatpush.msra.mxu0 %v231
    %452 = vmatpush.msra.mxu0 %v229
    %453 = vmatpush.msra.mxu0 %v227
    %454 = vmatpush.msra.mxu0 %v225
    %455 = vmatpush.msra.mxu0 %v223
    %456 = vmatmul.f32.gmra.mxu0 %v52
    %v457 = vpop.f32.mrf.mxu0
    %v458 = vadd.f32 %v435, %v457
    %459 = vmatmul.f32.gmra.mxu0 %v60
    %v460 = vpop.f32.mrf.mxu0
    %v461 = vadd.f32 %v438, %v460
    %462 = vdwg.mxu0
    %463 = vmatpush.msra.mxu0 %v285
    %464 = vmatpush.msra.mxu0 %v283
    %465 = vmatpush.msra.mxu0 %v281
    %466 = vmatpush.msra.mxu0 %v279
    %467 = vmatpush.msra.mxu0 %v277
    %468 = vmatpush.msra.mxu0 %v275
    %469 = vmatpush.msra.mxu0 %v273
    %470 = vmatpush.msra.mxu0 %v271
    %471 = vmatpush.msra.mxu0 %v269
    %472 = vmatpush.msra.mxu0 %v267
    %473 = vmatpush.msra.mxu0 %v265
    %474 = vmatpush.msra.mxu0 %v263
    %475 = vmatpush.msra.mxu0 %v261
    %476 = vmatpush.msra.mxu0 %v259
    %477 = vmatpush.msra.mxu0 %v257
    %478 = vmatpush.msra.mxu0 %v255
    %479 = vmatmul.f32.gmra.mxu0 %v53
    %v480 = vpop.f32.mrf.mxu0
    %v481 = vadd.f32 %v458, %v480
    %482 = vmatmul.f32.gmra.mxu0 %v61
    %v483 = vpop.f32.mrf.mxu0
    %v484 = vadd.f32 %v461, %v483
    %485 = vdwg.mxu0
    %486 = vmatpush.msra.mxu0 %v317
    %487 = vmatpush.msra.mxu0 %v315
    %488 = vmatpush.msra.mxu0 %v313
    %489 = vmatpush.msra.mxu0 %v311
    %490 = vmatpush.msra.mxu0 %v309
    %491 = vmatpush.msra.mxu0 %v307
    %492 = vmatpush.msra.mxu0 %v305
    %493 = vmatpush.msra.mxu0 %v303
    %494 = vmatpush.msra.mxu0 %v301
    %495 = vmatpush.msra.mxu0 %v299
    %496 = vmatpush.msra.mxu0 %v297
    %497 = vmatpush.msra.mxu0 %v295
    %498 = vmatpush.msra.mxu0 %v293
    %499 = vmatpush.msra.mxu0 %v291
    %500 = vmatpush.msra.mxu0 %v289
    %501 = vmatpush.msra.mxu0 %v287
    %502 = vmatmul.f32.gmra.mxu0 %v54
    %v503 = vpop.f32.mrf.mxu0
    %v504 = vadd.f32 %v481, %v503
    %505 = vmatmul.f32.gmra.mxu0 %v62
    %v506 = vpop.f32.mrf.mxu0
    %v507 = vadd.f32 %v484, %v506
    %508 = vdwg.mxu0
    %509 = vmatpush.msra.mxu0 %v94
    %510 = vmatpush.msra.mxu0 %v92
    %511 = vmatpush.msra.mxu0 %v90
    %512 = vmatpush.msra.mxu0 %v88
    %513 = vmatpush.msra.mxu0 %v86
    %514 = vmatpush.msra.mxu0 %v84
    %515 = vmatpush.msra.mxu0 %v82
    %516 = vmatpush.msra.mxu0 %v80
    %517 = vmatpush.msra.mxu0 %v78
    %518 = vmatpush.msra.mxu0 %v76
    %519 = vmatpush.msra.mxu0 %v74
    %520 = vmatpush.msra.mxu0 %v72
    %521 = vmatpush.msra.mxu0 %v70
    %522 = vmatpush.msra.mxu0 %v68
    %523 = vmatpush.msra.mxu0 %v66
    %524 = vmatpush.msra.mxu0 %v64
    %525 = vmatmul.f32.gmra.mxu0 %v47
    %v526 = vpop.f32.mrf.mxu0
    %v527 = vadd.f32 %v322, %v526
    %528 = vmatmul.f32.gmra.mxu0 %v55
    %v529 = vpop.f32.mrf.mxu0
    %v530 = vadd.f32 %v322, %v529
    %531 = vdwg.mxu0
    %532 = vmatpush.msra.mxu0 %v126
    %533 = vmatpush.msra.mxu0 %v124
    %534 = vmatpush.msra.mxu0 %v122
    %535 = vmatpush.msra.mxu0 %v120
    %536 = vmatpush.msra.mxu0 %v118
    %537 = vmatpush.msra.mxu0 %v116
    %538 = vmatpush.msra.mxu0 %v114
    %539 = vmatpush.msra.mxu0 %v112
    %540 = vmatpush.msra.mxu0 %v110
    %541 = vmatpush.msra.mxu0 %v108
    %542 = vmatpush.msra.mxu0 %v106
    %543 = vmatpush.msra.mxu0 %v104
    %544 = vmatpush.msra.mxu0 %v102
    %545 = vmatpush.msra.mxu0 %v100
    %546 = vmatpush.msra.mxu0 %v98
    %547 = vmatpush.msra.mxu0 %v96
    %548 = vmatmul.f32.gmra.mxu0 %v48
    %v549 = vpop.f32.mrf.mxu0
    %v550 = vadd.f32 %v527, %v549
    %551 = vmatmul.f32.gmra.mxu0 %v56
    %v552 = vpop.f32.mrf.mxu0
    %v553 = vadd.f32 %v530, %v552
    %554 = vdwg.mxu0
    %555 = vmatpush.msra.mxu0 %v158
    %556 = vmatpush.msra.mxu0 %v156
    %557 = vmatpush.msra.mxu0 %v154
    %558 = vmatpush.msra.mxu0 %v152
    %559 = vmatpush.msra.mxu0 %v150
    %560 = vmatpush.msra.mxu0 %v148
    %561 = vmatpush.msra.mxu0 %v146
    %562 = vmatpush.msra.mxu0 %v144
    %563 = vmatpush.msra.mxu0 %v142
    %564 = vmatpush.msra.mxu0 %v140
    %565 = vmatpush.msra.mxu0 %v138
    %566 = vmatpush.msra.mxu0 %v136
    %567 = vmatpush.msra.mxu0 %v134
    %568 = vmatpush.msra.mxu0 %v132
    %569 = vmatpush.msra.mxu0 %v130
    %570 = vmatpush.msra.mxu0 %v128
    %571 = vmatmul.f32.gmra.mxu0 %v49
    %v572 = vpop.f32.mrf.mxu0
    %v573 = vadd.f32 %v550, %v572
    %574 = vmatmul.f32.gmra.mxu0 %v57
    %v575 = vpop.f32.mrf.mxu0
    %v576 = vadd.f32 %v553, %v575
    %577 = vdwg.mxu0
    %578 = vmatpush.msra.mxu0 %v190
    %579 = vmatpush.msra.mxu0 %v188
    %580 = vmatpush.msra.mxu0 %v186
    %581 = vmatpush.msra.mxu0 %v184
    %582 = vmatpush.msra.mxu0 %v182
    %583 = vmatpush.msra.mxu0 %v180
    %584 = vmatpush.msra.mxu0 %v178
    %585 = vmatpush.msra.mxu0 %v176
    %586 = vmatpush.msra.mxu0 %v174
    %587 = vmatpush.msra.mxu0 %v172
    %588 = vmatpush.msra.mxu0 %v170
    %589 = vmatpush.msra.mxu0 %v168
    %590 = vmatpush.msra.mxu0 %v166
    %591 = vmatpush.msra.mxu0 %v164
    %592 = vmatpush.msra.mxu0 %v162
    %593 = vmatpush.msra.mxu0 %v160
    %594 = vmatmul.f32.gmra.mxu0 %v50
    %v595 = vpop.f32.mrf.mxu0
    %v596 = vadd.f32 %v573, %v595
    %597 = vmatmul.f32.gmra.mxu0 %v58
    %v598 = vpop.f32.mrf.mxu0
    %v599 = vadd.f32 %v576, %v598
    %600 = vdwg.mxu0
    %601 = vmatpush.msra.mxu0 %v222
    %602 = vmatpush.msra.mxu0 %v220
    %603 = vmatpush.msra.mxu0 %v218
    %604 = vmatpush.msra.mxu0 %v216
    %605 = vmatpush.msra.mxu0 %v214
    %606 = vmatpush.msra.mxu0 %v212
    %607 = vmatpush.msra.mxu0 %v210
    %608 = vmatpush.msra.mxu0 %v208
    %609 = vmatpush.msra.mxu0 %v206
    %610 = vmatpush.msra.mxu0 %v204
    %611 = vmatpush.msra.mxu0 %v202
    %612 = vmatpush.msra.mxu0 %v200
    %613 = vmatpush.msra.mxu0 %v198
    %614 = vmatpush.msra.mxu0 %v196
    %615 = vmatpush.msra.mxu0 %v194
    %616 = vmatpush.msra.mxu0 %v192
    %617 = vmatmul.f32.gmra.mxu0 %v51
    %v618 = vpop.f32.mrf.mxu0
    %v619 = vadd.f32 %v596, %v618
    %620 = vmatmul.f32.gmra.mxu0 %v59
    %v621 = vpop.f32.mrf.mxu0
    %v622 = vadd.f32 %v599, %v621
    %623 = vdwg.mxu0
    %624 = vmatpush.msra.mxu0 %v254
    %625 = vmatpush.msra.mxu0 %v252
    %626 = vmatpush.msra.mxu0 %v250
    %627 = vmatpush.msra.mxu0 %v248
    %628 = vmatpush.msra.mxu0 %v246
    %629 = vmatpush.msra.mxu0 %v244
    %630 = vmatpush.msra.mxu0 %v242
    %631 = vmatpush.msra.mxu0 %v240
    %632 = vmatpush.msra.mxu0 %v238
    %633 = vmatpush.msra.mxu0 %v236
    %634 = vmatpush.msra.mxu0 %v234
    %635 = vmatpush.msra.mxu0 %v232
    %636 = vmatpush.msra.mxu0 %v230
    %637 = vmatpush.msra.mxu0 %v228
    %638 = vmatpush.msra.mxu0 %v226
    %639 = vmatpush.msra.mxu0 %v224
    %640 = vmatmul.f32.gmra.mxu0 %v52
    %v641 = vpop.f32.mrf.mxu0
    %v642 = vadd.f32 %v619, %v641
    %643 = vmatmul.f32.gmra.mxu0 %v60
    %v644 = vpop.f32.mrf.mxu0
    %v645 = vadd.f32 %v622, %v644
    %646 = vdwg.mxu0
    %647 = vmatpush.msra.mxu0 %v286
    %648 = vmatpush.msra.mxu0 %v284
    %649 = vmatpush.msra.mxu0 %v282
    %650 = vmatpush.msra.mxu0 %v280
    %651 = vmatpush.msra.mxu0 %v278
    %652 = vmatpush.msra.mxu0 %v276
    %653 = vmatpush.msra.mxu0 %v274
    %654 = vmatpush.msra.mxu0 %v272
    %655 = vmatpush.msra.mxu0 %v270
    %656 = vmatpush.msra.mxu0 %v268
    %657 = vmatpush.msra.mxu0 %v266
    %658 = vmatpush.msra.mxu0 %v264
    %659 = vmatpush.msra.mxu0 %v262
    %660 = vmatpush.msra.mxu0 %v260
    %661 = vmatpush.msra.mxu0 %v258
    %662 = vmatpush.msra.mxu0 %v256
    %663 = vmatmul.f32.gmra.mxu0 %v53
    %v664 = vpop.f32.mrf.mxu0
    %v665 = vadd.f32 %v642, %v664
    %666 = vmatmul.f32.gmra.mxu0 %v61
    %v667 = vpop.f32.mrf.mxu0
    %v668 = vadd.f32 %v645, %v667
    %669 = vdwg.mxu0
    %670 = vmatpush.msra.mxu0 %v318
    %671 = vmatpush.msra.mxu0 %v316
    %672 = vmatpush.msra.mxu0 %v314
    %673 = vmatpush.msra.mxu0 %v312
    %674 = vmatpush.msra.mxu0 %v310
    %675 = vmatpush.msra.mxu0 %v308
    %676 = vmatpush.msra.mxu0 %v306
    %677 = vmatpush.msra.mxu0 %v304
    %678 = vmatpush.msra.mxu0 %v302
    %679 = vmatpush.msra.mxu0 %v300
    %680 = vmatpush.msra.mxu0 %v298
    %681 = vmatpush.msra.mxu0 %v296
    %682 = vmatpush.msra.mxu0 %v294
    %683 = vmatpush.msra.mxu0 %v292
    %684 = vmatpush.msra.mxu0 %v290
    %685 = vmatpush.msra.mxu0 %v288
    %686 = vmatmul.f32.gmra.mxu0 %v54
    %v687 = vpop.f32.mrf.mxu0
    %v688 = vadd.f32 %v665, %v687
    %689 = vmatmul.f32.gmra.mxu0 %v62
    %v690 = vpop.f32.mrf.mxu0
    %v691 = vadd.f32 %v668, %v690
    %692 = vdwg.mxu0
    %v693 = vld [vmem:[%s5] sm:$0xff]
    %v694 = vld [vmem:[%s5 + $0x8] sm:$0xff]
    %v695 = vld [vmem:[%s5 + $0x10] sm:$0xff]
    %v696 = vld [vmem:[%s5 + $0x18] sm:$0xff]
    %v697 = vld [vmem:[%s5 + $0x20] sm:$0xff]
    %v698 = vld [vmem:[%s5 + $0x28] sm:$0xff]
    %v699 = vld [vmem:[%s5 + $0x30] sm:$0xff]
    %v700 = vld [vmem:[%s5 + $0x38] sm:$0xff]
    %v701 = vld [vmem:[%s5 + $0x40] sm:$0xff]
    %v702 = vld [vmem:[%s5 + $0x48] sm:$0xff]
    %v703 = vld [vmem:[%s5 + $0x50] sm:$0xff]
    %v704 = vld [vmem:[%s5 + $0x58] sm:$0xff]
    %v705 = vld [vmem:[%s5 + $0x60] sm:$0xff]
    %v706 = vld [vmem:[%s5 + $0x68] sm:$0xff]
    %v707 = vld [vmem:[%s5 + $0x70] sm:$0xff]
    %v708 = vld [vmem:[%s5 + $0x78] sm:$0xff]
    %v709 = vld [vmem:[%s6] sm:$0x1]
    %v711 = vperm.slane %v709, 0
    %713 = vmatpush.msra.mxu0 %v708
    %714 = vmatpush.msra.mxu0 %v707
    %715 = vmatpush.msra.mxu0 %v706
    %716 = vmatpush.msra.mxu0 %v705
    %717 = vmatpush.msra.mxu0 %v704
    %718 = vmatpush.msra.mxu0 %v703
    %719 = vmatpush.msra.mxu0 %v702
    %720 = vmatpush.msra.mxu0 %v701
    %721 = vmatpush.msra.mxu0 %v700
    %722 = vmatpush.msra.mxu0 %v699
    %723 = vmatpush.msra.mxu0 %v698
    %724 = vmatpush.msra.mxu0 %v697
    %725 = vmatpush.msra.mxu0 %v696
    %726 = vmatpush.msra.mxu0 %v695
    %727 = vmatpush.msra.mxu0 %v694
    %728 = vmatpush.msra.mxu0 %v693
    %729 = vmatmul.f32.gmra.mxu0 %v688
    %v730 = vpop.f32.mrf.mxu0
    %v731 = vadd.f32 %v711, %v730
    %732 = vdwg.mxu0
    %733 = vst [vmem:[#allocation4] sm:$0x3] %v731
    %v734 = vld [vmem:[%s3] sm:$0xff]
    %v735 = vld [vmem:[%s3 + $0x8] sm:$0xff]
    %v736 = vld [vmem:[%s3 + $0x10] sm:$0xff]
    %v737 = vld [vmem:[%s3 + $0x18] sm:$0xff]
    %v738 = vld [vmem:[%s3 + $0x20] sm:$0xff]
    %v739 = vld [vmem:[%s3 + $0x28] sm:$0xff]
    %v740 = vld [vmem:[%s3 + $0x30] sm:$0xff]
    %v741 = vld [vmem:[%s3 + $0x38] sm:$0xff]
    %v742 = vld [vmem:[%s3 + $0x40] sm:$0xff]
    %v743 = vld [vmem:[%s3 + $0x48] sm:$0xff]
    %v744 = vld [vmem:[%s3 + $0x50] sm:$0xff]
    %v745 = vld [vmem:[%s3 + $0x58] sm:$0xff]
    %v746 = vld [vmem:[%s3 + $0x60] sm:$0xff]
    %v747 = vld [vmem:[%s3 + $0x68] sm:$0xff]
    %v748 = vld [vmem:[%s3 + $0x70] sm:$0xff]
    %v749 = vld [vmem:[%s3 + $0x78] sm:$0xff]
    %v750 = vld [vmem:[%s4] sm:$0x1]
    %v752 = vperm.slane %v750, 0
    %v755 = vrot.slane %v504, 2
    %757 = vmatpush.msra.mxu0 %v749
    %758 = vmatpush.msra.mxu0 %v748
    %759 = vmatpush.msra.mxu0 %v747
    %760 = vmatpush.msra.mxu0 %v746
    %761 = vmatpush.msra.mxu0 %v745
    %762 = vmatpush.msra.mxu0 %v744
    %763 = vmatpush.msra.mxu0 %v743
    %764 = vmatpush.msra.mxu0 %v742
    %765 = vmatpush.msra.mxu0 %v741
    %766 = vmatpush.msra.mxu0 %v740
    %767 = vmatpush.msra.mxu0 %v739
    %768 = vmatpush.msra.mxu0 %v738
    %769 = vmatpush.msra.mxu0 %v737
    %770 = vmatpush.msra.mxu0 %v736
    %771 = vmatpush.msra.mxu0 %v735
    %772 = vmatpush.msra.mxu0 %v734
    %773 = vmatmul.f32.gmra.mxu0 %v755
    %v774 = vpop.f32.mrf.mxu0
    %v775 = vadd.f32 %v752, %v774
    %776 = vdwg.mxu0
    %777 = vst [vmem:[#allocation2] sm:$0xf] %v775
    %v778 = vmul.f32 %v688, %v688
    %vm779 = vcmask 1041408
    %v780 = vsel %vm779, %v778, 0.0
    %781 = vadd.xlane.f32.xlu0 %v780
    %v782 = vpop.xlane.xlu0 %781
    %v783 = vmax.f32 %v782, 1e-24
    %v784 = vrsqrt.pop %v783
    %v785 = vmul.f32 %v784, %v783
    %v786 = vmul.f32 %v785, %v784
    %v787 = vmul.f32 0.5, %v786
    %v788 = vsub.f32 1.5, %v787
    %v789 = vmul.f32 %v784, %v788
    %vm790 = vweird.f32 %v783
    %vm791 = vweird.f32 %v784
    %vm792 = vmor %vm790, %vm791
    %v793 = vsel %vm792, %v784, %v789
    %v794 = vmul.f32 %v688, %v793
    %795 = vst [vmem:[#allocation7] sm:$0x3] %v794
    %v796 = vmul.f32 %v691, %v691
    %vm797 = vcmask 1047558
    %v798 = vsel %vm797, %v778, 0.0
    %799 = vadd.xlane.f32.xlu0 %v798
    %v800 = vpop.xlane.xlu0 %799
    %vm801 = vcmask 1043456
    %v802 = vsel %vm801, %v796, 0.0
    %803 = vadd.xlane.f32.xlu0 %v802
    %v804 = vpop.xlane.xlu0 %803
    %v805 = vmax.f32 %v800, 1e-24
    %v806 = vmax.f32 %v804, 1e-24
    %v807 = vrsqrt.pop %v805
    %v808 = vmul.f32 %v807, %v805
    %v809 = vmul.f32 %v808, %v807
    %v810 = vmul.f32 0.5, %v809
    %v811 = vsub.f32 1.5, %v810
    %v812 = vmul.f32 %v807, %v811
    %vm813 = vweird.f32 %v805
    %vm814 = vweird.f32 %v807
    %vm815 = vmor %vm813, %vm814
    %v816 = vsel %vm815, %v807, %v812
    %v817 = vrsqrt.pop %v806
    %v818 = vmul.f32 %v817, %v806
    %v819 = vmul.f32 %v818, %v817
    %v820 = vmul.f32 0.5, %v819
    %v821 = vsub.f32 1.5, %v820
    %v822 = vmul.f32 %v817, %v821
    %vm823 = vweird.f32 %v806
    %vm824 = vweird.f32 %v817
    %vm825 = vmor %vm823, %vm824
    %v826 = vsel %vm825, %v817, %v822
    %v827 = vmul.f32 %v688, %v816
    %v828 = vmul.f32 %v691, %v826
    %829 = vst [vmem:[%s16 - $0x6] sm:$0xc0] %v827
    %830 = vst [vmem:[%s16 + $0x2] sm:$0xf] %v828
    %v831 = vld [vmem:[%s7] sm:$0xff]
    %v832 = vld [vmem:[%s7 + $0x8] sm:$0xff]
    %v833 = vld [vmem:[%s7 + $0x10] sm:$0xff]
    %v834 = vld [vmem:[%s7 + $0x18] sm:$0xff]
    %v835 = vld [vmem:[%s7 + $0x20] sm:$0xff]
    %v836 = vld [vmem:[%s7 + $0x28] sm:$0xff]
    %v837 = vld [vmem:[%s7 + $0x30] sm:$0xff]
    %v838 = vld [vmem:[%s7 + $0x38] sm:$0xff]
    %v839 = vld [vmem:[%s7 + $0x40] sm:$0xff]
    %v840 = vld [vmem:[%s7 + $0x48] sm:$0xff]
    %v841 = vld [vmem:[%s7 + $0x50] sm:$0xff]
    %v842 = vld [vmem:[%s7 + $0x58] sm:$0xff]
    %v843 = vld [vmem:[%s7 + $0x60] sm:$0xff]
    %v844 = vld [vmem:[%s7 + $0x68] sm:$0xff]
    %v845 = vld [vmem:[%s7 + $0x70] sm:$0xff]
    %v846 = vld [vmem:[%s7 + $0x78] sm:$0xff]
    %v847 = vld [vmem:[%s8] sm:$0x1]
    %v849 = vperm.slane %v847, 0
    %v851 = vrot.slane %v504, 6
    %853 = vmatpush.msra.mxu0 %v846
    %854 = vmatpush.msra.mxu0 %v845
    %855 = vmatpush.msra.mxu0 %v844
    %856 = vmatpush.msra.mxu0 %v843
    %857 = vmatpush.msra.mxu0 %v842
    %858 = vmatpush.msra.mxu0 %v841
    %859 = vmatpush.msra.mxu0 %v840
    %860 = vmatpush.msra.mxu0 %v839
    %861 = vmatpush.msra.mxu0 %v838
    %862 = vmatpush.msra.mxu0 %v837
    %863 = vmatpush.msra.mxu0 %v836
    %864 = vmatpush.msra.mxu0 %v835
    %865 = vmatpush.msra.mxu0 %v834
    %866 = vmatpush.msra.mxu0 %v833
    %867 = vmatpush.msra.mxu0 %v832
    %868 = vmatpush.msra.mxu0 %v831
    %869 = vmatmul.f32.gmra.mxu0 %v851
    %v870 = vpop.f32.mrf.mxu0
    %v871 = vadd.f32 %v849, %v870
    %872 = vdwg.mxu0
    %s873 = scalar_lea.vmem %s7, 128
    %v874 = vld [vmem:[%s873] sm:$0xff]
    %v875 = vld [vmem:[%s873 + $0x8] sm:$0xff]
    %v876 = vld [vmem:[%s873 + $0x10] sm:$0xff]
    %v877 = vld [vmem:[%s873 + $0x18] sm:$0xff]
    %v878 = vld [vmem:[%s873 + $0x20] sm:$0xff]
    %v879 = vld [vmem:[%s873 + $0x28] sm:$0xff]
    %v880 = vld [vmem:[%s873 + $0x30] sm:$0xff]
    %v881 = vld [vmem:[%s873 + $0x38] sm:$0xff]
    %v882 = vld [vmem:[%s873 + $0x40] sm:$0xff]
    %v883 = vld [vmem:[%s873 + $0x48] sm:$0xff]
    %v884 = vld [vmem:[%s873 + $0x50] sm:$0xff]
    %v885 = vld [vmem:[%s873 + $0x58] sm:$0xff]
    %v886 = vld [vmem:[%s873 + $0x60] sm:$0xff]
    %v887 = vld [vmem:[%s873 + $0x68] sm:$0xff]
    %v888 = vld [vmem:[%s873 + $0x70] sm:$0xff]
    %v889 = vld [vmem:[%s873 + $0x78] sm:$0xff]
    %890 = vmatpush.msra.mxu0 %v889
    %891 = vmatpush.msra.mxu0 %v888
    %892 = vmatpush.msra.mxu0 %v887
    %893 = vmatpush.msra.mxu0 %v886
    %894 = vmatpush.msra.mxu0 %v885
    %895 = vmatpush.msra.mxu0 %v884
    %896 = vmatpush.msra.mxu0 %v883
    %897 = vmatpush.msra.mxu0 %v882
    %898 = vmatpush.msra.mxu0 %v881
    %899 = vmatpush.msra.mxu0 %v880
    %900 = vmatpush.msra.mxu0 %v879
    %901 = vmatpush.msra.mxu0 %v878
    %902 = vmatpush.msra.mxu0 %v877
    %903 = vmatpush.msra.mxu0 %v876
    %904 = vmatpush.msra.mxu0 %v875
    %905 = vmatpush.msra.mxu0 %v874
    %906 = vmatmul.f32.gmra.mxu0 %v507
    %v907 = vpop.f32.mrf.mxu0
    %v908 = vadd.f32 0.0, %v907
    %909 = vdwg.mxu0
    %v910 = vadd.f32 %v871, %v908
    %s911 = scalar_lea.vmem %s7, 256
    %v912 = vld [vmem:[%s911] sm:$0xff]
    %v913 = vld [vmem:[%s911 + $0x8] sm:$0xff]
    %v914 = vld [vmem:[%s911 + $0x10] sm:$0xff]
    %v915 = vld [vmem:[%s911 + $0x18] sm:$0xff]
    %v916 = vld [vmem:[%s911 + $0x20] sm:$0xff]
    %v917 = vld [vmem:[%s911 + $0x28] sm:$0xff]
    %v918 = vld [vmem:[%s911 + $0x30] sm:$0xff]
    %v919 = vld [vmem:[%s911 + $0x38] sm:$0xff]
    %v920 = vld [vmem:[%s911 + $0x40] sm:$0xff]
    %v921 = vld [vmem:[%s911 + $0x48] sm:$0xff]
    %v922 = vld [vmem:[%s911 + $0x50] sm:$0xff]
    %v923 = vld [vmem:[%s911 + $0x58] sm:$0xff]
    %v924 = vld [vmem:[%s911 + $0x60] sm:$0xff]
    %v925 = vld [vmem:[%s911 + $0x68] sm:$0xff]
    %v926 = vld [vmem:[%s911 + $0x70] sm:$0xff]
    %v927 = vld [vmem:[%s911 + $0x78] sm:$0xff]
    %v929 = vrot.slane %v507, 2
    %931 = vmatpush.msra.mxu0 %v927
    %932 = vmatpush.msra.mxu0 %v926
    %933 = vmatpush.msra.mxu0 %v925
    %934 = vmatpush.msra.mxu0 %v924
    %935 = vmatpush.msra.mxu0 %v923
    %936 = vmatpush.msra.mxu0 %v922
    %937 = vmatpush.msra.mxu0 %v921
    %938 = vmatpush.msra.mxu0 %v920
    %939 = vmatpush.msra.mxu0 %v919
    %940 = vmatpush.msra.mxu0 %v918
    %941 = vmatpush.msra.mxu0 %v917
    %942 = vmatpush.msra.mxu0 %v916
    %943 = vmatpush.msra.mxu0 %v915
    %944 = vmatpush.msra.mxu0 %v914
    %945 = vmatpush.msra.mxu0 %v913
    %946 = vmatpush.msra.mxu0 %v912
    %947 = vmatmul.f32.gmra.mxu0 %v929
    %v948 = vpop.f32.mrf.mxu0
    %v949 = vadd.f32 0.0, %v948
    %950 = vdwg.mxu0
    %v951 = vadd.f32 %v910, %v949
    %v952 = vmul.f32 %v951, %v951
    %v953 = vsel %vm779, %v952, 0.0
    %954 = vadd.xlane.f32.xlu0 %v953
    %v955 = vpop.xlane.xlu0 %954
    %v956 = vmax.f32 %v955, 1e-24
    %v957 = vrsqrt.pop %v956
    %v958 = vmul.f32 %v957, %v956
    %v959 = vmul.f32 %v958, %v957
    %v960 = vmul.f32 0.5, %v959
    %v961 = vsub.f32 1.5, %v960
    %v962 = vmul.f32 %v957, %v961
    %vm963 = vweird.f32 %v956
    %vm964 = vweird.f32 %v957
    %vm965 = vmor %vm963, %vm964
    %v966 = vsel %vm965, %v957, %v962
    %v967 = vmul.f32 %v951, %v966
    %968 = vst [vmem:[#allocation6] sm:$0x3] %v967
    %v969 = vld [vmem:[%s9] sm:$0xff]
    %v970 = vld [vmem:[%s9 + $0x8] sm:$0xff]
    %v971 = vld [vmem:[%s9 + $0x10] sm:$0xff]
    %v972 = vld [vmem:[%s9 + $0x18] sm:$0xff]
    %v973 = vld [vmem:[%s9 + $0x20] sm:$0xff]
    %v974 = vld [vmem:[%s9 + $0x28] sm:$0xff]
    %v975 = vld [vmem:[%s9 + $0x30] sm:$0xff]
    %v976 = vld [vmem:[%s9 + $0x38] sm:$0xff]
    %v977 = vld [vmem:[%s9 + $0x40] sm:$0xff]
    %v978 = vld [vmem:[%s9 + $0x48] sm:$0xff]
    %v979 = vld [vmem:[%s9 + $0x50] sm:$0xff]
    %v980 = vld [vmem:[%s9 + $0x58] sm:$0xff]
    %v981 = vld [vmem:[%s9 + $0x60] sm:$0xff]
    %v982 = vld [vmem:[%s9 + $0x68] sm:$0xff]
    %v983 = vld [vmem:[%s9 + $0x70] sm:$0xff]
    %v984 = vld [vmem:[%s9 + $0x78] sm:$0xff]
    %v985 = vld [vmem:[%s10] sm:$0x1]
    %v987 = vperm.slane %v985, 0
    %989 = vmatpush.msra.mxu0 %v984
    %990 = vmatpush.msra.mxu0 %v983
    %991 = vmatpush.msra.mxu0 %v982
    %992 = vmatpush.msra.mxu0 %v981
    %993 = vmatpush.msra.mxu0 %v980
    %994 = vmatpush.msra.mxu0 %v979
    %995 = vmatpush.msra.mxu0 %v978
    %996 = vmatpush.msra.mxu0 %v977
    %997 = vmatpush.msra.mxu0 %v976
    %998 = vmatpush.msra.mxu0 %v975
    %999 = vmatpush.msra.mxu0 %v974
    %1000 = vmatpush.msra.mxu0 %v973
    %1001 = vmatpush.msra.mxu0 %v972
    %1002 = vmatpush.msra.mxu0 %v971
    %1003 = vmatpush.msra.mxu0 %v970
    %1004 = vmatpush.msra.mxu0 %v969
    %1005 = vmatmul.f32.gmra.mxu0 %v504
    %v1006 = vpop.f32.mrf.mxu0
    %v1007 = vadd.f32 %v987, %v1006
    %1008 = vdwg.mxu0
    %v1009 = vmul.f32 %v1007, %v1007
    %v1010 = vsel %vm779, %v1009, 0.0
    %1011 = vadd.xlane.f32.xlu0 %v1010
    %v1012 = vpop.xlane.xlu0 %1011
    %v1013 = vmax.f32 %v1012, 1e-24
    %v1014 = vrsqrt.pop %v1013
    %v1015 = vmul.f32 %v1014, %v1013
    %v1016 = vmul.f32 %v1015, %v1014
    %v1017 = vmul.f32 0.5, %v1016
    %v1018 = vsub.f32 1.5, %v1017
    %v1019 = vmul.f32 %v1014, %v1018
    %vm1020 = vweird.f32 %v1013
    %vm1021 = vweird.f32 %v1014
    %vm1022 = vmor %vm1020, %vm1021
    %v1023 = vsel %vm1022, %v1014, %v1019
    %v1024 = vmul.f32 %v1007, %v1023
    %1025 = vst [vmem:[#allocation9] sm:$0x3] %v1024
    // Predicated region
    $region46: #{adamv2_forward.1} parent=1 // pred_check
      _
    $region47: #{adamv2_forward.1} parent=1 // pred_check_branch
      %1027 = sbr.rel (0) target = $region49
    $region48: #{adamv2_forward.1} parent=1 // pred_region
      %1029 = vsyncadd [#allocation3], 0
      %s1031 = sshll.u32 [#allocation2], 4
      %s1032 = int_to_ptr.vmem [resolvable:$true] %s1031
      %s1033 = sshll.u32 %s11, 4
      %s1034 = int_to_ptr.hbm [resolvable:$true] %s1033
      %1036 = dma.vmem_to_hbm [thread:$0]  %s1032, 64, %s1034, [#allocation3]
    $region49: #{adamv2_forward.1} parent=1 // pred_fallthru
      _
    // Predicated region
    $region50: #{adamv2_forward.1} parent=1 // pred_check
      _
    $region51: #{adamv2_forward.1} parent=1 // pred_check_branch
      %1038 = sbr.rel (0) target = $region53
    $region52: #{adamv2_forward.1} parent=1 // pred_region
      %1040 = vsyncadd [#allocation5], 0
      %s1042 = sshll.u32 [#allocation4], 4
      %s1043 = int_to_ptr.vmem [resolvable:$true] %s1042
      %s1044 = sshll.u32 %s12, 4
      %s1045 = int_to_ptr.hbm [resolvable:$true] %s1044
      %1047 = dma.vmem_to_hbm [thread:$0]  %s1043, 32, %s1045, [#allocation5]
    $region53: #{adamv2_forward.1} parent=1 // pred_fallthru
      _
    // Predicated region
    $region54: #{adamv2_forward.1} parent=1 // pred_check
      _
    $region55: #{adamv2_forward.1} parent=1 // pred_check_branch
      %1049 = sbr.rel (0) target = $region57
    $region56: #{adamv2_forward.1} parent=1 // pred_region
      %1051 = vsyncadd [#allocation5], 0
      %s1053 = sshll.u32 [#allocation6], 4
      %s1054 = int_to_ptr.vmem [resolvable:$true] %s1053
      %s1055 = sshll.u32 %s13, 4
      %s1056 = int_to_ptr.hbm [resolvable:$true] %s1055
      %1058 = dma.vmem_to_hbm [thread:$0]  %s1054, 32, %s1056, [#allocation5]
    $region57: #{adamv2_forward.1} parent=1 // pred_fallthru
      _
    // Predicated region
    $region58: #{adamv2_forward.1} parent=1 // pred_check
      _
    $region59: #{adamv2_forward.1} parent=1 // pred_check_branch
      %1060 = sbr.rel (0) target = $region61
    $region60: #{adamv2_forward.1} parent=1 // pred_region
      %1062 = vsyncadd [#allocation8], 0
      %s1064 = sshll.u32 [#allocation7], 4
      %s1065 = int_to_ptr.vmem [resolvable:$true] %s1064
      %s1066 = sshll.u32 %s14, 4
      %s1067 = int_to_ptr.hbm [resolvable:$true] %s1066
      %1069 = dma.vmem_to_hbm [thread:$0]  %s1065, 32, %s1067, [#allocation8]
    $region61: #{adamv2_forward.1} parent=1 // pred_fallthru
      _
    // Predicated region
    $region62: #{adamv2_forward.1} parent=1 // pred_check
      _
    $region63: #{adamv2_forward.1} parent=1 // pred_check_branch
      %1071 = sbr.rel (0) target = $region65
    $region64: #{adamv2_forward.1} parent=1 // pred_region
      %1073 = vsyncadd [#allocation8], 0
      %s1075 = sshll.u32 [#allocation9], 4
      %s1076 = int_to_ptr.vmem [resolvable:$true] %s1075
      %s1077 = sshll.u32 %s15, 4
      %s1078 = int_to_ptr.hbm [resolvable:$true] %s1077
      %1080 = dma.vmem_to_hbm [thread:$0]  %s1076, 32, %s1078, [#allocation8]
    $region65: #{adamv2_forward.1} parent=1 // pred_fallthru
      _
    // Predicated region
    $region66: #{adamv2_forward.1} parent=1 // pred_check
      _
    $region67: #{adamv2_forward.1} parent=1 // pred_check_branch
      %1082 = sbr.rel (0) target = $region69
    $region68: #{adamv2_forward.1} parent=1 // pred_region
      _
    $region69: #{adamv2_forward.1} parent=1 // pred_fallthru
      _
    // Predicated region
    $region70: #{adamv2_forward.1} parent=1 // pred_check
      _
    $region71: #{adamv2_forward.1} parent=1 // pred_check_branch
      %1084 = sbr.rel (0) target = $region73
    $region72: #{adamv2_forward.1} parent=1 // pred_region
      %1086 = dma.done [#allocation3], 64
    $region73: #{adamv2_forward.1} parent=1 // pred_fallthru
      _
    // Predicated region
    $region74: #{adamv2_forward.1} parent=1 // pred_check
      _
    $region75: #{adamv2_forward.1} parent=1 // pred_check_branch
      %1088 = sbr.rel (0) target = $region77
    $region76: #{adamv2_forward.1} parent=1 // pred_region
      %1090 = dma.done [#allocation5], 32
    $region77: #{adamv2_forward.1} parent=1 // pred_fallthru
      _
    // Predicated region
    $region78: #{adamv2_forward.1} parent=1 // pred_check
      _
    $region79: #{adamv2_forward.1} parent=1 // pred_check_branch
      %1092 = sbr.rel (0) target = $region81
    $region80: #{adamv2_forward.1} parent=1 // pred_region
      %1094 = dma.done [#allocation5], 32
    $region81: #{adamv2_forward.1} parent=1 // pred_fallthru
      _
    // Predicated region
    $region82: #{adamv2_forward.1} parent=1 // pred_check
      _
    $region83: #{adamv2_forward.1} parent=1 // pred_check_branch
      %1096 = sbr.rel (0) target = $region85
    $region84: #{adamv2_forward.1} parent=1 // pred_region
      %1098 = dma.done [#allocation8], 32
    $region85: #{adamv2_forward.1} parent=1 // pred_fallthru
      _
    // Predicated region
    $region86: #{adamv2_forward.1} parent=1 // pred_check
      _
    $region87: #{adamv2_forward.1} parent=1 // pred_check_branch
      %1100 = sbr.rel (0) target = $region89
    $region88: #{adamv2_forward.1} parent=1 // pred_region
      %1102 = dma.done [#allocation8], 32
    $region89: #{adamv2_forward.1} parent=1 // pred_fallthru
      _
    // Predicated region
    $region90: #{adamv2_forward.1} parent=1 // pred_check
      _
    $region91: #{adamv2_forward.1} parent=1 // pred_check_branch
      %1104 = sbr.rel (0) target = $region93
    $region92: #{adamv2_forward.1} parent=1 // pred_region
      _
    $region93: #{adamv2_forward.1} parent=1 // pred_fallthru
      _
    %1105 = vsyncpa [#allocation3], 1
    %1106 = vsyncpa [#allocation5], 1
    %1107 = vsyncpa [#allocation8], 1

</llo_original>
